<compile_context>
chip_gen: v7x
topology: tpu7x:2x2x1
jax: 0.10.0
libtpu: 0.0.40
codegen_flags: <defaults>
</compile_context>

<pallas_src>
import jax
import jax.numpy as jnp
from jax import lax
from jax.experimental import pallas as pl
from jax.experimental.pallas import tpu as pltpu


# -----------------------------------------------------------------------------
# Pallas kernel: one UHGGraphSAGELayer, tiled over (src rows) x (dst rows)
# -----------------------------------------------------------------------------
def uhg_sage_layer_kernel(xs_ref, xd_ref, inv_aa_ref, inv_bb_ref, adj_ref,
                          wcat_ref, out_ref, acc_ref):
    """
    xs_ref    : [tm, F+1] src rows, pre-multiplied by UHG signs [-1..-1, +1]
    xd_ref    : [tk, F+1] dst rows (raw x)
    inv_aa_ref: [tm, 1]   signed, eps-guarded reciprocal of <x_src, x_src>
    inv_bb_ref: [1, tk]   signed, eps-guarded reciprocal of <x_dst, x_dst>
    adj_ref   : [tm, tk]  bf16 edge multiplicities A[src, dst]
    wcat_ref  : [2F, H]   concat([weight_neigh.T, -weight_self.T])  (f32)
    out_ref   : [tm, H]   relu(neigh @ Wn.T + feats @ Ws.T)
    acc_ref   : [tm, F+1] f32 scratch: cols :F -> sum_d w * feats[d],
                                       col  F -> sum_d w   (weight sum)
    """
    k = pl.program_id(1)
    nk = pl.num_programs(1)

    @pl.when(k == 0)
    def _init():
        acc_ref[...] = jnp.zeros_like(acc_ref)

    f = xs_ref.shape[-1] - 1
    xs_s = xs_ref[...]                       # [tm, F+1]  (spatial negated)
    xd = xd_ref[...]                         # [tk, F+1]

    # UHG Gram:  ab[i, j] = <x_src[i], x_dst[j]>  (metric folded into xs_s).
    # Single K = F+1 MXU contraction, bf16 feeds, f32 accumulation.
    ab = lax.dot_general(xs_s.astype(jnp.bfloat16), xd.astype(jnp.bfloat16),
                         (((1,), (1,)), ((), ())),
                         preferred_element_type=jnp.float32)        # [tm, tk]

    # -quadrance = (aa*bb - ab^2) / (aa*bb)  =  1 - ab^2 * (1/aa) * (1/bb)
    # Signed safe reciprocals are precomputed per node in the wrapper, so this
    # is pure VPU broadcast work on the [tm, tk] tile.
    neg_quad = 1.0 - (ab * ab) * inv_aa_ref[...] * inv_bb_ref[...]  # [tm, tk]

    # Edge weights: A * exp(-quad).  exp stays f32 (accuracy); the clamp keeps
    # near-light-like pairs finite.  The adjacency multiply runs in bf16.
    ew = jnp.exp(jnp.minimum(neg_quad, 80.0))                       # [tm, tk]
    w = adj_ref[...] * ew.astype(jnp.bfloat16)                      # [tm, tk]

    # Weighted aggregation with the weight-sum folded into the same matmul:
    # rhs = [feats_dst | 1]  ->  acc[:, :F] += w @ feats,  acc[:, F] += sum(w)
    lane = lax.broadcasted_iota(jnp.int32, (1, f + 1), 1)
    rhs = jnp.where(lane == f, 1.0, xd).astype(jnp.bfloat16)        # [tk, F+1]
    acc_ref[...] += jnp.dot(w, rhs, preferred_element_type=jnp.float32)

    @pl.when(k == nk - 1)
    def _finalize():
        acc = acc_ref[...]
        # True divide (only O(tm*F)); matches the reference clamp_min(1e-6).
        neigh = acc[:, :f] / jnp.maximum(acc[:, f:], 1e-6)          # [tm, F]
        # Fused projection: [neigh | -feats_src] @ [Wn.T ; -Ws.T]
        #                 =  neigh @ Wn.T + feats_src @ Ws.T
        cat = jnp.concatenate([neigh, xs_s[:, :f]], axis=-1)        # [tm, 2F]
        comb = jnp.dot(cat, wcat_ref[...],
                       preferred_element_type=jnp.float32)          # [tm, H]
        out_ref[...] = jnp.maximum(comb, 0.0).astype(out_ref.dtype)


# -----------------------------------------------------------------------------
# Wrapper: tile selection, per-node precompute, BlockSpecs / grid
# -----------------------------------------------------------------------------
def _choose_tiles(n):
    """Pick (tm, tk) dividing n and satisfying the (8, 128) tiling rules.

    tk (reduction axis) is pushed as large as sensible (cap 2048); tm is
    capped at 256 and, where cleanly possible, at n/2 so the 'parallel' axis
    has >= 2 steps for v7x's two TensorCores.
    """
    if n % 128 == 0:
        tk = min(2048, n)
        while n % tk:
            tk //= 2
    else:
        tk = n                      # full extent is always legal
    if n % 8 == 0:
        tm = min(256, n)
        while n % tm:
            tm //= 2
        if tm == n and (n // 2) % 8 == 0:
            tm = n // 2             # ensure >= 2 parallel grid steps
    else:
        tm = n
    return tm, tk


def uhg_sage_layer(x, adj_bf16, w_cat, *, tm=None, tk=None):
    """x: [N, F+1] f32,  adj_bf16: [N, N] bf16 counts,  w_cat: [2F, H] f32."""
    n, fp1 = x.shape
    f = fp1 - 1
    h = w_cat.shape[1]
    dtm, dtk = _choose_tiles(n)
    tm = dtm if tm is None else tm
    tk = dtk if tk is None else tk
    assert n % tm == 0 and n % tk == 0, (n, tm, tk)

    # ---- per-node preprocessing hoisted out of the N^2 kernel (O(N*F)) -----
    signs = jnp.concatenate([-jnp.ones((1, f), jnp.float32),
                             jnp.ones((1, 1), jnp.float32)], axis=1)
    x_signed = x * signs                                   # [N, F+1]
    aa = jnp.sum(x_signed * x, axis=-1, keepdims=True)     # [N, 1] = <x, x>
    # signed, eps-guarded reciprocal (sign(0)->+1: benign divergence from the
    # reference, which would produce inf/NaN on exactly-null points).
    inv = jnp.where(aa >= 0.0, 1.0, -1.0) / jnp.maximum(jnp.abs(aa), 1e-9)
    inv_aa = inv                                           # [N, 1]
    inv_bb = inv.reshape(1, n)                             # [1, N]

    grid = (n // tm, n // tk)   # (src-row tiles "parallel", dst reduction)
    return pl.pallas_call(
        uhg_sage_layer_kernel,
        out_shape=jax.ShapeDtypeStruct((n, h), jnp.float32),
        grid_spec=pltpu.PrefetchScalarGridSpec(
            num_scalar_prefetch=0,
            grid=grid,
            in_specs=[
                pl.BlockSpec((tm, fp1), lambda i, k: (i, 0)),    # x_signed src
                pl.BlockSpec((tk, fp1), lambda i, k: (k, 0)),    # x dst
                pl.BlockSpec((tm, 1), lambda i, k: (i, 0)),      # 1/<a,a>
                pl.BlockSpec((1, tk), lambda i, k: (0, k)),      # 1/<b,b>
                pl.BlockSpec((tm, tk), lambda i, k: (i, k)),     # adjacency
                pl.BlockSpec((2 * f, h), lambda i, k: (0, 0)),   # fused W
            ],
            out_specs=pl.BlockSpec((tm, h), lambda i, k: (i, 0)),
            scratch_shapes=[pltpu.VMEM((tm, fp1), jnp.float32)],
        ),
        compiler_params=pltpu.CompilerParams(
            dimension_semantics=("parallel", "arbitrary"),
            vmem_limit_bytes=48 * 1024 * 1024),
    )(x_signed, x, inv_aa, inv_bb, adj_bf16, w_cat)


# -----------------------------------------------------------------------------
# Model: parameter init + forward (JAX glue)
# -----------------------------------------------------------------------------
def xavier_uniform(key, out_f, in_f):
    limit = jnp.sqrt(6.0 / (in_f + out_f))
    return jax.random.uniform(key, (out_f, in_f), jnp.float32, -limit, limit)


def init_uhg_graphsage(key, in_channels, hidden_channels, out_channels,
                       num_layers):
    actual_in = in_channels - 1
    dims = [(actual_in, hidden_channels)]
    for _ in range(num_layers - 2):
        dims.append((hidden_channels, hidden_channels))
    dims.append((hidden_channels, out_channels))
    params = []
    for fi, fo in dims:
        key, k1, k2 = jax.random.split(key, 3)
        w_neigh = xavier_uniform(k1, fo, fi)       # [out, in]
        w_self = xavier_uniform(k2, fo, fi)        # [out, in]
        # fused projection for [neigh | -feats] inputs (src features arrive
        # sign-flipped, so weight_self is negated here — see kernel docstring)
        params.append(
            {"w_cat": jnp.concatenate([w_neigh.T, -w_self.T], axis=0)})
    return params


def uhg_graphsage_forward(params, x, edge_index, *, tm=None, tk=None):
    n = x.shape[0]
    row, col = edge_index[0], edge_index[1]
    # dense adjacency with edge multiplicities, streamed to the kernel in bf16
    adj = (jnp.zeros((n, n), jnp.float32).at[row, col].add(1.0)
           ).astype(jnp.bfloat16)

    x = x.astype(jnp.float32)
    for layer in params[:-1]:
        combined = uhg_sage_layer(x, adj, layer["w_cat"], tm=tm, tk=tk)
        # relu of the width-1 homogeneous column happens here (kernel output
        # stays lane-dense); dropout is identity in eval/inference mode.
        homog = jnp.maximum(x[:, -1:], 0.0)
        x = jnp.concatenate([combined, homog], axis=-1)
    # final layer: the module returns x[:, :-1], i.e. exactly relu(combined).
    return uhg_sage_layer(x, adj, params[-1]["w_cat"], tm=tm, tk=tk)


# -----------------------------------------------------------------------------
if __name__ == "__main__":
    key = jax.random.PRNGKey(0)
    (k_x, k_row, k_col, k_params,
     k_x2, k_row2, k_col2) = jax.random.split(key, 7)

    # ---- small case (shapes implied by the module defaults) -----------------
    N = 16                 # nodes
    in_channels = 9        # 8 spatial features + 1 homogeneous coord
    hidden_channels = 32
    out_channels = 8
    num_layers = 3
    num_edges = 40

    feats = jax.random.normal(k_x, (N, in_channels - 1), jnp.float32)
    x = jnp.concatenate([feats, jnp.ones((N, 1), jnp.float32)], axis=1)
    row = jax.random.randint(k_row, (num_edges,), 0, N)
    col = jax.random.randint(k_col, (num_edges,), 0, N)
    edge_index = jnp.stack([row, col])

    params = init_uhg_graphsage(k_params, in_channels, hidden_channels,
                                out_channels, num_layers)

    fwd = jax.jit(uhg_graphsage_forward, static_argnames=("tm", "tk"))
    out = fwd(params, x, edge_index)
    jax.block_until_ready(out)
    assert out.shape == (N, out_channels), out.shape
    assert bool(jnp.all(jnp.isfinite(out)))

    # ---- moderate case exercising the tiled reduction grid (2 x 2) ----------
    N2, E2 = 256, 2048
    feats2 = jax.random.normal(k_x2, (N2, in_channels - 1), jnp.float32)
    x2 = jnp.concatenate([feats2, jnp.ones((N2, 1), jnp.float32)], axis=1)
    row2 = jax.random.randint(k_row2, (E2,), 0, N2)
    col2 = jax.random.randint(k_col2, (E2,), 0, N2)
    out2 = fwd(params, x2, jnp.stack([row2, col2]), tm=128, tk=128)
    jax.block_until_ready(out2)
    assert out2.shape == (N2, out_channels), out2.shape
    assert bool(jnp.all(jnp.isfinite(out2)))

    # ---- same moderate case with auto tile selection (tm=128, tk=256) -------
    out3 = fwd(params, x2, jnp.stack([row2, col2]))
    jax.block_until_ready(out3)
    assert out3.shape == (N2, out_channels), out3.shape
    assert bool(jnp.all(jnp.isfinite(out3)))

    print("KERNEL_OK")
</pallas_src>

<mosaic_0001>
module attributes {stable_mosaic.version = 11 : i64} {
  func.func @uhg_sage_layer_kernel(%arg0: i32, %arg1: i32, %arg2: memref<8x9xf32, #tpu.memory_space<vmem>>, %arg3: memref<16x9xf32, #tpu.memory_space<vmem>>, %arg4: memref<8x1xf32, #tpu.memory_space<vmem>>, %arg5: memref<1x16xf32, #tpu.memory_space<vmem>>, %arg6: memref<8x16xbf16, #tpu.memory_space<vmem>>, %arg7: memref<16x32xf32, #tpu.memory_space<vmem>>, %arg8: memref<8x32xf32, #tpu.memory_space<vmem>>, %arg9: memref<8x9xf32, #tpu.memory_space<vmem>>) attributes {dimension_semantics = [#tpu.dimension_semantics<parallel>, #tpu.dimension_semantics<arbitrary>], iteration_bounds = array<i64: 2, 1>, scalar_prefetch = 0 : i64, scratch_operands = 1 : i64, tpu.core_type = #tpu.core_type<tc>, window_params = [{transform_indices = @transform_0, window_bounds = array<i64: 8, 9>}, {transform_indices = @transform_1, window_bounds = array<i64: 16, 9>}, {transform_indices = @transform_2, window_bounds = array<i64: 8, 1>}, {transform_indices = @transform_3, window_bounds = array<i64: 1, 16>}, {transform_indices = @transform_4, window_bounds = array<i64: 8, 16>}, {pipeline_mode = #tpu.pipeline_mode<synchronous>, transform_indices = @transform_5, window_bounds = array<i64: 16, 32>}, {transform_indices = @transform_6, window_bounds = array<i64: 8, 32>}]} {
    %c0_i32 = arith.constant 0 : i32
    %0 = arith.cmpi eq, %arg1, %c0_i32 : i32
    %1 = arith.extui %0 : i1 to i32
    %c0_i32_0 = arith.constant 0 : i32
    %2 = arith.cmpi ne, %1, %c0_i32_0 : i32
    scf.if %2 {
      %cst_20 = arith.constant 0.000000e+00 : f32
      %38 = vector.broadcast %cst_20 : f32 to vector<8x9xf32>
      %c0_21 = arith.constant 0 : index
      %c0_22 = arith.constant 0 : index
      %39 = vector.load %arg9[%c0_21, %c0_22] : memref<8x9xf32, #tpu.memory_space<vmem>>, vector<8x9xf32>
      tpu.vector_store %arg9[%c0_21, %c0_22], %38 {strides = array<i32>} : memref<8x9xf32, #tpu.memory_space<vmem>>, vector<8x9xf32>,
    } else {
    }
    %c0 = arith.constant 0 : index
    %c0_1 = arith.constant 0 : index
    %3 = vector.load %arg2[%c0, %c0_1] : memref<8x9xf32, #tpu.memory_space<vmem>>, vector<8x9xf32>
    %c0_2 = arith.constant 0 : index
    %c0_3 = arith.constant 0 : index
    %4 = vector.load %arg3[%c0_2, %c0_3] : memref<16x9xf32, #tpu.memory_space<vmem>>, vector<16x9xf32>
    %5 = arith.truncf %3 : vector<8x9xf32> to vector<8x9xbf16>
    %6 = arith.truncf %4 : vector<16x9xf32> to vector<16x9xbf16>
    %cst = arith.constant dense<0.000000e+00> : vector<8x16xf32>
    %7 = tpu.matmul %5, %6, %cst {dimension_numbers = #tpu.dot_dimension_numbers<[1], [1], [0], [0], [0, 0, 1, 0], [], []>} : vector<8x9xbf16>, vector<16x9xbf16>, vector<8x16xf32> -> vector<8x16xf32>
    %8 = arith.mulf %7, %7 : vector<8x16xf32>
    %c0_4 = arith.constant 0 : index
    %c0_5 = arith.constant 0 : index
    %9 = vector.load %arg4[%c0_4, %c0_5] : memref<8x1xf32, #tpu.memory_space<vmem>>, vector<8x1xf32>
    %10 = vector.broadcast %9 : vector<8x1xf32> to vector<8x16xf32>
    %11 = arith.mulf %8, %10 : vector<8x16xf32>
    %c0_6 = arith.constant 0 : index
    %c0_7 = arith.constant 0 : index
    %12 = vector.load %arg5[%c0_6, %c0_7] : memref<1x16xf32, #tpu.memory_space<vmem>>, vector<1x16xf32>
    %13 = vector.broadcast %12 : vector<1x16xf32> to vector<8x16xf32>
    %14 = arith.mulf %11, %13 : vector<8x16xf32>
    %cst_8 = arith.constant 1.000000e+00 : f32
    %15 = vector.broadcast %cst_8 : f32 to vector<8x16xf32>
    %16 = arith.subf %15, %14 : vector<8x16xf32>
    %cst_9 = arith.constant 8.000000e+01 : f32
    %17 = vector.broadcast %cst_9 : f32 to vector<8x16xf32>
    %18 = arith.minimumf %16, %17 : vector<8x16xf32>
    %19 = math.exp %18 : vector<8x16xf32>
    %c0_10 = arith.constant 0 : index
    %c0_11 = arith.constant 0 : index
    %20 = vector.load %arg6[%c0_10, %c0_11] : memref<8x16xbf16, #tpu.memory_space<vmem>>, vector<8x16xbf16>
    %21 = arith.truncf %19 : vector<8x16xf32> to vector<8x16xbf16>
    %22 = arith.mulf %20, %21 : vector<8x16xbf16>
    %23 = tpu.iota {dimensions = array<i32: 1>} : vector<1x9xi32>
    %c8_i32 = arith.constant 8 : i32
    %24 = vector.broadcast %c8_i32 : i32 to vector<1x9xi32>
    %25 = arith.cmpi eq, %23, %24 : vector<1x9xi32>
    %cst_12 = arith.constant 1.000000e+00 : f32
    %26 = vector.shape_cast %25 : vector<1x9xi1> to vector<1x9xi1>
    %27 = vector.broadcast %26 : vector<1x9xi1> to vector<16x9xi1>
    %28 = vector.broadcast %cst_12 : f32 to vector<16x9xf32>
    %29 = arith.select %27, %28, %4 : vector<16x9xi1>, vector<16x9xf32>
    %30 = arith.truncf %29 : vector<16x9xf32> to vector<16x9xbf16>
    %c0_13 = arith.constant 0 : index
    %c0_14 = arith.constant 0 : index
    %31 = vector.load %arg9[%c0_13, %c0_14] : memref<8x9xf32, #tpu.memory_space<vmem>>, vector<8x9xf32>
    %cst_15 = arith.constant dense<0.000000e+00> : vector<8x9xf32>
    %32 = tpu.matmul %22, %30, %cst_15 {dimension_numbers = #tpu.dot_dimension_numbers<[1], [0], [0], [1], [0, 0, 1, 1], [], []>} : vector<8x16xbf16>, vector<16x9xbf16>, vector<8x9xf32> -> vector<8x9xf32>
    %33 = arith.addf %31, %32 : vector<8x9xf32>
    %c0_16 = arith.constant 0 : index
    %c0_17 = arith.constant 0 : index
    %34 = vector.load %arg9[%c0_16, %c0_17] : memref<8x9xf32, #tpu.memory_space<vmem>>, vector<8x9xf32>
    tpu.vector_store %arg9[%c0_16, %c0_17], %33 {strides = array<i32>} : memref<8x9xf32, #tpu.memory_space<vmem>>, vector<8x9xf32>,
    %c0_i32_18 = arith.constant 0 : i32
    %35 = arith.cmpi eq, %arg1, %c0_i32_18 : i32
    %36 = arith.extui %35 : i1 to i32
    %c0_i32_19 = arith.constant 0 : i32
    %37 = arith.cmpi ne, %36, %c0_i32_19 : i32
    scf.if %37 {
      %c0_20 = arith.constant 0 : index
      %c0_21 = arith.constant 0 : index
      %38 = vector.load %arg9[%c0_20, %c0_21] : memref<8x9xf32, #tpu.memory_space<vmem>>, vector<8x9xf32>
      %39 = vector.extract_strided_slice %38 {offsets = [0, 0], sizes = [8, 8], strides = [1, 1]} : vector<8x9xf32> to vector<8x8xf32>
      %40 = vector.extract_strided_slice %38 {offsets = [0, 8], sizes = [8, 1], strides = [1, 1]} : vector<8x9xf32> to vector<8x1xf32>
      %cst_22 = arith.constant 9.99999997E-7 : f32
      %41 = vector.broadcast %cst_22 : f32 to vector<8x1xf32>
      %42 = arith.maximumf %40, %41 : vector<8x1xf32>
      %43 = vector.broadcast %42 : vector<8x1xf32> to vector<8x8xf32>
      %44 = arith.divf %39, %43 : vector<8x8xf32>
      %45 = vector.extract_strided_slice %3 {offsets = [0, 0], sizes = [8, 8], strides = [1, 1]} : vector<8x9xf32> to vector<8x8xf32>
      %46 = tpu.concatenate %44, %45 in 1 : vector<8x8xf32>, vector<8x8xf32> -> vector<8x16xf32>
      %c0_23 = arith.constant 0 : index
      %c0_24 = arith.constant 0 : index
      %47 = vector.load %arg7[%c0_23, %c0_24] : memref<16x32xf32, #tpu.memory_space<vmem>>, vector<16x32xf32>
      %cst_25 = arith.constant dense<0.000000e+00> : vector<8x32xf32>
      %48 = tpu.matmul %46, %47, %cst_25 {dimension_numbers = #tpu.dot_dimension_numbers<[1], [0], [0], [1], [0, 0, 1, 1], [], []>} : vector<8x16xf32>, vector<16x32xf32>, vector<8x32xf32> -> vector<8x32xf32>
      %cst_26 = arith.constant 0.000000e+00 : f32
      %49 = vector.broadcast %cst_26 : f32 to vector<8x32xf32>
      %50 = arith.maximumf %48, %49 : vector<8x32xf32>
      %c0_27 = arith.constant 0 : index
      %c0_28 = arith.constant 0 : index
      %51 = vector.load %arg8[%c0_27, %c0_28] : memref<8x32xf32, #tpu.memory_space<vmem>>, vector<8x32xf32>
      tpu.vector_store %arg8[%c0_27, %c0_28], %50 {strides = array<i32>} : memref<8x32xf32, #tpu.memory_space<vmem>>, vector<8x32xf32>,
    } else {
    }
    return
  }
  func.func @transform_0(%arg0: i32, %arg1: i32) -> (i32, i32) {
    %c0_i32 = arith.constant 0 : i32
    %c0_i32_0 = arith.constant 0 : i32
    return %arg0, %c0_i32 : i32, i32
  }
  func.func @transform_1(%arg0: i32, %arg1: i32) -> (i32, i32) {
    %c0_i32 = arith.constant 0 : i32
    %c0_i32_0 = arith.constant 0 : i32
    return %arg1, %c0_i32 : i32, i32
  }
  func.func @transform_2(%arg0: i32, %arg1: i32) -> (i32, i32) {
    %c0_i32 = arith.constant 0 : i32
    %c0_i32_0 = arith.constant 0 : i32
    return %arg0, %c0_i32 : i32, i32
  }
  func.func @transform_3(%arg0: i32, %arg1: i32) -> (i32, i32) {
    %c0_i32 = arith.constant 0 : i32
    %c0_i32_0 = arith.constant 0 : i32
    return %c0_i32, %arg1 : i32, i32
  }
  func.func @transform_4(%arg0: i32, %arg1: i32) -> (i32, i32) {
    %c0_i32 = arith.constant 0 : i32
    return %arg0, %arg1 : i32, i32
  }
  func.func @transform_5(%arg0: i32, %arg1: i32) -> (i32, i32) {
    %c0_i32 = arith.constant 0 : i32
    %c0_i32_0 = arith.constant 0 : i32
    %c0_i32_1 = arith.constant 0 : i32
    return %c0_i32, %c0_i32_0 : i32, i32
  }
  func.func @transform_6(%arg0: i32, %arg1: i32) -> (i32, i32) {
    %c0_i32 = arith.constant 0 : i32
    %c0_i32_0 = arith.constant 0 : i32
    return %arg0, %c0_i32 : i32, i32
  }
}

module attributes {stable_mosaic.version = 11 : i64} {
  func.func @uhg_sage_layer_kernel(%arg0: i32, %arg1: i32, %arg2: memref<8x33xf32, #tpu.memory_space<vmem>>, %arg3: memref<16x33xf32, #tpu.memory_space<vmem>>, %arg4: memref<8x1xf32, #tpu.memory_space<vmem>>, %arg5: memref<1x16xf32, #tpu.memory_space<vmem>>, %arg6: memref<8x16xbf16, #tpu.memory_space<vmem>>, %arg7: memref<64x32xf32, #tpu.memory_space<vmem>>, %arg8: memref<8x32xf32, #tpu.memory_space<vmem>>, %arg9: memref<8x33xf32, #tpu.memory_space<vmem>>) attributes {dimension_semantics = [#tpu.dimension_semantics<parallel>, #tpu.dimension_semantics<arbitrary>], iteration_bounds = array<i64: 2, 1>, scalar_prefetch = 0 : i64, scratch_operands = 1 : i64, tpu.core_type = #tpu.core_type<tc>, window_params = [{transform_indices = @transform_0, window_bounds = array<i64: 8, 33>}, {transform_indices = @transform_1, window_bounds = array<i64: 16, 33>}, {transform_indices = @transform_2, window_bounds = array<i64: 8, 1>}, {transform_indices = @transform_3, window_bounds = array<i64: 1, 16>}, {transform_indices = @transform_4, window_bounds = array<i64: 8, 16>}, {pipeline_mode = #tpu.pipeline_mode<synchronous>, transform_indices = @transform_5, window_bounds = array<i64: 64, 32>}, {transform_indices = @transform_6, window_bounds = array<i64: 8, 32>}]} {
    %c0_i32 = arith.constant 0 : i32
    %0 = arith.cmpi eq, %arg1, %c0_i32 : i32
    %1 = arith.extui %0 : i1 to i32
    %c0_i32_0 = arith.constant 0 : i32
    %2 = arith.cmpi ne, %1, %c0_i32_0 : i32
    scf.if %2 {
      %cst_20 = arith.constant 0.000000e+00 : f32
      %38 = vector.broadcast %cst_20 : f32 to vector<8x33xf32>
      %c0_21 = arith.constant 0 : index
      %c0_22 = arith.constant 0 : index
      %39 = vector.load %arg9[%c0_21, %c0_22] : memref<8x33xf32, #tpu.memory_space<vmem>>, vector<8x33xf32>
      tpu.vector_store %arg9[%c0_21, %c0_22], %38 {strides = array<i32>} : memref<8x33xf32, #tpu.memory_space<vmem>>, vector<8x33xf32>,
    } else {
    }
    %c0 = arith.constant 0 : index
    %c0_1 = arith.constant 0 : index
    %3 = vector.load %arg2[%c0, %c0_1] : memref<8x33xf32, #tpu.memory_space<vmem>>, vector<8x33xf32>
    %c0_2 = arith.constant 0 : index
    %c0_3 = arith.constant 0 : index
    %4 = vector.load %arg3[%c0_2, %c0_3] : memref<16x33xf32, #tpu.memory_space<vmem>>, vector<16x33xf32>
    %5 = arith.truncf %3 : vector<8x33xf32> to vector<8x33xbf16>
    %6 = arith.truncf %4 : vector<16x33xf32> to vector<16x33xbf16>
    %cst = arith.constant dense<0.000000e+00> : vector<8x16xf32>
    %7 = tpu.matmul %5, %6, %cst {dimension_numbers = #tpu.dot_dimension_numbers<[1], [1], [0], [0], [0, 0, 1, 0], [], []>} : vector<8x33xbf16>, vector<16x33xbf16>, vector<8x16xf32> -> vector<8x16xf32>
    %8 = arith.mulf %7, %7 : vector<8x16xf32>
    %c0_4 = arith.constant 0 : index
    %c0_5 = arith.constant 0 : index
    %9 = vector.load %arg4[%c0_4, %c0_5] : memref<8x1xf32, #tpu.memory_space<vmem>>, vector<8x1xf32>
    %10 = vector.broadcast %9 : vector<8x1xf32> to vector<8x16xf32>
    %11 = arith.mulf %8, %10 : vector<8x16xf32>
    %c0_6 = arith.constant 0 : index
    %c0_7 = arith.constant 0 : index
    %12 = vector.load %arg5[%c0_6, %c0_7] : memref<1x16xf32, #tpu.memory_space<vmem>>, vector<1x16xf32>
    %13 = vector.broadcast %12 : vector<1x16xf32> to vector<8x16xf32>
    %14 = arith.mulf %11, %13 : vector<8x16xf32>
    %cst_8 = arith.constant 1.000000e+00 : f32
    %15 = vector.broadcast %cst_8 : f32 to vector<8x16xf32>
    %16 = arith.subf %15, %14 : vector<8x16xf32>
    %cst_9 = arith.constant 8.000000e+01 : f32
    %17 = vector.broadcast %cst_9 : f32 to vector<8x16xf32>
    %18 = arith.minimumf %16, %17 : vector<8x16xf32>
    %19 = math.exp %18 : vector<8x16xf32>
    %c0_10 = arith.constant 0 : index
    %c0_11 = arith.constant 0 : index
    %20 = vector.load %arg6[%c0_10, %c0_11] : memref<8x16xbf16, #tpu.memory_space<vmem>>, vector<8x16xbf16>
    %21 = arith.truncf %19 : vector<8x16xf32> to vector<8x16xbf16>
    %22 = arith.mulf %20, %21 : vector<8x16xbf16>
    %23 = tpu.iota {dimensions = array<i32: 1>} : vector<1x33xi32>
    %c32_i32 = arith.constant 32 : i32
    %24 = vector.broadcast %c32_i32 : i32 to vector<1x33xi32>
    %25 = arith.cmpi eq, %23, %24 : vector<1x33xi32>
    %cst_12 = arith.constant 1.000000e+00 : f32
    %26 = vector.shape_cast %25 : vector<1x33xi1> to vector<1x33xi1>
    %27 = vector.broadcast %26 : vector<1x33xi1> to vector<16x33xi1>
    %28 = vector.broadcast %cst_12 : f32 to vector<16x33xf32>
    %29 = arith.select %27, %28, %4 : vector<16x33xi1>, vector<16x33xf32>
    %30 = arith.truncf %29 : vector<16x33xf32> to vector<16x33xbf16>
    %c0_13 = arith.constant 0 : index
    %c0_14 = arith.constant 0 : index
    %31 = vector.load %arg9[%c0_13, %c0_14] : memref<8x33xf32, #tpu.memory_space<vmem>>, vector<8x33xf32>
    %cst_15 = arith.constant dense<0.000000e+00> : vector<8x33xf32>
    %32 = tpu.matmul %22, %30, %cst_15 {dimension_numbers = #tpu.dot_dimension_numbers<[1], [0], [0], [1], [0, 0, 1, 1], [], []>} : vector<8x16xbf16>, vector<16x33xbf16>, vector<8x33xf32> -> vector<8x33xf32>
    %33 = arith.addf %31, %32 : vector<8x33xf32>
    %c0_16 = arith.constant 0 : index
    %c0_17 = arith.constant 0 : index
    %34 = vector.load %arg9[%c0_16, %c0_17] : memref<8x33xf32, #tpu.memory_space<vmem>>, vector<8x33xf32>
    tpu.vector_store %arg9[%c0_16, %c0_17], %33 {strides = array<i32>} : memref<8x33xf32, #tpu.memory_space<vmem>>, vector<8x33xf32>,
    %c0_i32_18 = arith.constant 0 : i32
    %35 = arith.cmpi eq, %arg1, %c0_i32_18 : i32
    %36 = arith.extui %35 : i1 to i32
    %c0_i32_19 = arith.constant 0 : i32
    %37 = arith.cmpi ne, %36, %c0_i32_19 : i32
    scf.if %37 {
      %c0_20 = arith.constant 0 : index
      %c0_21 = arith.constant 0 : index
      %38 = vector.load %arg9[%c0_20, %c0_21] : memref<8x33xf32, #tpu.memory_space<vmem>>, vector<8x33xf32>
      %39 = vector.extract_strided_slice %38 {offsets = [0, 0], sizes = [8, 32], strides = [1, 1]} : vector<8x33xf32> to vector<8x32xf32>
      %40 = vector.extract_strided_slice %38 {offsets = [0, 32], sizes = [8, 1], strides = [1, 1]} : vector<8x33xf32> to vector<8x1xf32>
      %cst_22 = arith.constant 9.99999997E-7 : f32
      %41 = vector.broadcast %cst_22 : f32 to vector<8x1xf32>
      %42 = arith.maximumf %40, %41 : vector<8x1xf32>
      %43 = vector.broadcast %42 : vector<8x1xf32> to vector<8x32xf32>
      %44 = arith.divf %39, %43 : vector<8x32xf32>
      %45 = vector.extract_strided_slice %3 {offsets = [0, 0], sizes = [8, 32], strides = [1, 1]} : vector<8x33xf32> to vector<8x32xf32>
      %46 = tpu.concatenate %44, %45 in 1 : vector<8x32xf32>, vector<8x32xf32> -> vector<8x64xf32>
      %c0_23 = arith.constant 0 : index
      %c0_24 = arith.constant 0 : index
      %47 = vector.load %arg7[%c0_23, %c0_24] : memref<64x32xf32, #tpu.memory_space<vmem>>, vector<64x32xf32>
      %cst_25 = arith.constant dense<0.000000e+00> : vector<8x32xf32>
      %48 = tpu.matmul %46, %47, %cst_25 {dimension_numbers = #tpu.dot_dimension_numbers<[1], [0], [0], [1], [0, 0, 1, 1], [], []>} : vector<8x64xf32>, vector<64x32xf32>, vector<8x32xf32> -> vector<8x32xf32>
      %cst_26 = arith.constant 0.000000e+00 : f32
      %49 = vector.broadcast %cst_26 : f32 to vector<8x32xf32>
      %50 = arith.maximumf %48, %49 : vector<8x32xf32>
      %c0_27 = arith.constant 0 : index
      %c0_28 = arith.constant 0 : index
      %51 = vector.load %arg8[%c0_27, %c0_28] : memref<8x32xf32, #tpu.memory_space<vmem>>, vector<8x32xf32>
      tpu.vector_store %arg8[%c0_27, %c0_28], %50 {strides = array<i32>} : memref<8x32xf32, #tpu.memory_space<vmem>>, vector<8x32xf32>,
    } else {
    }
    return
  }
  func.func @transform_0(%arg0: i32, %arg1: i32) -> (i32, i32) {
    %c0_i32 = arith.constant 0 : i32
    %c0_i32_0 = arith.constant 0 : i32
    return %arg0, %c0_i32 : i32, i32
  }
  func.func @transform_1(%arg0: i32, %arg1: i32) -> (i32, i32) {
    %c0_i32 = arith.constant 0 : i32
    %c0_i32_0 = arith.constant 0 : i32
    return %arg1, %c0_i32 : i32, i32
  }
  func.func @transform_2(%arg0: i32, %arg1: i32) -> (i32, i32) {
    %c0_i32 = arith.constant 0 : i32
    %c0_i32_0 = arith.constant 0 : i32
    return %arg0, %c0_i32 : i32, i32
  }
  func.func @transform_3(%arg0: i32, %arg1: i32) -> (i32, i32) {
    %c0_i32 = arith.constant 0 : i32
    %c0_i32_0 = arith.constant 0 : i32
    return %c0_i32, %arg1 : i32, i32
  }
  func.func @transform_4(%arg0: i32, %arg1: i32) -> (i32, i32) {
    %c0_i32 = arith.constant 0 : i32
    return %arg0, %arg1 : i32, i32
  }
  func.func @transform_5(%arg0: i32, %arg1: i32) -> (i32, i32) {
    %c0_i32 = arith.constant 0 : i32
    %c0_i32_0 = arith.constant 0 : i32
    %c0_i32_1 = arith.constant 0 : i32
    return %c0_i32, %c0_i32_0 : i32, i32
  }
  func.func @transform_6(%arg0: i32, %arg1: i32) -> (i32, i32) {
    %c0_i32 = arith.constant 0 : i32
    %c0_i32_0 = arith.constant 0 : i32
    return %arg0, %c0_i32 : i32, i32
  }
}

module attributes {stable_mosaic.version = 11 : i64} {
  func.func @uhg_sage_layer_kernel(%arg0: i32, %arg1: i32, %arg2: memref<8x33xf32, #tpu.memory_space<vmem>>, %arg3: memref<16x33xf32, #tpu.memory_space<vmem>>, %arg4: memref<8x1xf32, #tpu.memory_space<vmem>>, %arg5: memref<1x16xf32, #tpu.memory_space<vmem>>, %arg6: memref<8x16xbf16, #tpu.memory_space<vmem>>, %arg7: memref<64x8xf32, #tpu.memory_space<vmem>>, %arg8: memref<8x8xf32, #tpu.memory_space<vmem>>, %arg9: memref<8x33xf32, #tpu.memory_space<vmem>>) attributes {dimension_semantics = [#tpu.dimension_semantics<parallel>, #tpu.dimension_semantics<arbitrary>], iteration_bounds = array<i64: 2, 1>, scalar_prefetch = 0 : i64, scratch_operands = 1 : i64, tpu.core_type = #tpu.core_type<tc>, window_params = [{transform_indices = @transform_0, window_bounds = array<i64: 8, 33>}, {transform_indices = @transform_1, window_bounds = array<i64: 16, 33>}, {transform_indices = @transform_2, window_bounds = array<i64: 8, 1>}, {transform_indices = @transform_3, window_bounds = array<i64: 1, 16>}, {transform_indices = @transform_4, window_bounds = array<i64: 8, 16>}, {pipeline_mode = #tpu.pipeline_mode<synchronous>, transform_indices = @transform_5, window_bounds = array<i64: 64, 8>}, {transform_indices = @transform_6, window_bounds = array<i64: 8, 8>}]} {
    %c0_i32 = arith.constant 0 : i32
    %0 = arith.cmpi eq, %arg1, %c0_i32 : i32
    %1 = arith.extui %0 : i1 to i32
    %c0_i32_0 = arith.constant 0 : i32
    %2 = arith.cmpi ne, %1, %c0_i32_0 : i32
    scf.if %2 {
      %cst_20 = arith.constant 0.000000e+00 : f32
      %38 = vector.broadcast %cst_20 : f32 to vector<8x33xf32>
      %c0_21 = arith.constant 0 : index
      %c0_22 = arith.constant 0 : index
      %39 = vector.load %arg9[%c0_21, %c0_22] : memref<8x33xf32, #tpu.memory_space<vmem>>, vector<8x33xf32>
      tpu.vector_store %arg9[%c0_21, %c0_22], %38 {strides = array<i32>} : memref<8x33xf32, #tpu.memory_space<vmem>>, vector<8x33xf32>,
    } else {
    }
    %c0 = arith.constant 0 : index
    %c0_1 = arith.constant 0 : index
    %3 = vector.load %arg2[%c0, %c0_1] : memref<8x33xf32, #tpu.memory_space<vmem>>, vector<8x33xf32>
    %c0_2 = arith.constant 0 : index
    %c0_3 = arith.constant 0 : index
    %4 = vector.load %arg3[%c0_2, %c0_3] : memref<16x33xf32, #tpu.memory_space<vmem>>, vector<16x33xf32>
    %5 = arith.truncf %3 : vector<8x33xf32> to vector<8x33xbf16>
    %6 = arith.truncf %4 : vector<16x33xf32> to vector<16x33xbf16>
    %cst = arith.constant dense<0.000000e+00> : vector<8x16xf32>
    %7 = tpu.matmul %5, %6, %cst {dimension_numbers = #tpu.dot_dimension_numbers<[1], [1], [0], [0], [0, 0, 1, 0], [], []>} : vector<8x33xbf16>, vector<16x33xbf16>, vector<8x16xf32> -> vector<8x16xf32>
    %8 = arith.mulf %7, %7 : vector<8x16xf32>
    %c0_4 = arith.constant 0 : index
    %c0_5 = arith.constant 0 : index
    %9 = vector.load %arg4[%c0_4, %c0_5] : memref<8x1xf32, #tpu.memory_space<vmem>>, vector<8x1xf32>
    %10 = vector.broadcast %9 : vector<8x1xf32> to vector<8x16xf32>
    %11 = arith.mulf %8, %10 : vector<8x16xf32>
    %c0_6 = arith.constant 0 : index
    %c0_7 = arith.constant 0 : index
    %12 = vector.load %arg5[%c0_6, %c0_7] : memref<1x16xf32, #tpu.memory_space<vmem>>, vector<1x16xf32>
    %13 = vector.broadcast %12 : vector<1x16xf32> to vector<8x16xf32>
    %14 = arith.mulf %11, %13 : vector<8x16xf32>
    %cst_8 = arith.constant 1.000000e+00 : f32
    %15 = vector.broadcast %cst_8 : f32 to vector<8x16xf32>
    %16 = arith.subf %15, %14 : vector<8x16xf32>
    %cst_9 = arith.constant 8.000000e+01 : f32
    %17 = vector.broadcast %cst_9 : f32 to vector<8x16xf32>
    %18 = arith.minimumf %16, %17 : vector<8x16xf32>
    %19 = math.exp %18 : vector<8x16xf32>
    %c0_10 = arith.constant 0 : index
    %c0_11 = arith.constant 0 : index
    %20 = vector.load %arg6[%c0_10, %c0_11] : memref<8x16xbf16, #tpu.memory_space<vmem>>, vector<8x16xbf16>
    %21 = arith.truncf %19 : vector<8x16xf32> to vector<8x16xbf16>
    %22 = arith.mulf %20, %21 : vector<8x16xbf16>
    %23 = tpu.iota {dimensions = array<i32: 1>} : vector<1x33xi32>
    %c32_i32 = arith.constant 32 : i32
    %24 = vector.broadcast %c32_i32 : i32 to vector<1x33xi32>
    %25 = arith.cmpi eq, %23, %24 : vector<1x33xi32>
    %cst_12 = arith.constant 1.000000e+00 : f32
    %26 = vector.shape_cast %25 : vector<1x33xi1> to vector<1x33xi1>
    %27 = vector.broadcast %26 : vector<1x33xi1> to vector<16x33xi1>
    %28 = vector.broadcast %cst_12 : f32 to vector<16x33xf32>
    %29 = arith.select %27, %28, %4 : vector<16x33xi1>, vector<16x33xf32>
    %30 = arith.truncf %29 : vector<16x33xf32> to vector<16x33xbf16>
    %c0_13 = arith.constant 0 : index
    %c0_14 = arith.constant 0 : index
    %31 = vector.load %arg9[%c0_13, %c0_14] : memref<8x33xf32, #tpu.memory_space<vmem>>, vector<8x33xf32>
    %cst_15 = arith.constant dense<0.000000e+00> : vector<8x33xf32>
    %32 = tpu.matmul %22, %30, %cst_15 {dimension_numbers = #tpu.dot_dimension_numbers<[1], [0], [0], [1], [0, 0, 1, 1], [], []>} : vector<8x16xbf16>, vector<16x33xbf16>, vector<8x33xf32> -> vector<8x33xf32>
    %33 = arith.addf %31, %32 : vector<8x33xf32>
    %c0_16 = arith.constant 0 : index
    %c0_17 = arith.constant 0 : index
    %34 = vector.load %arg9[%c0_16, %c0_17] : memref<8x33xf32, #tpu.memory_space<vmem>>, vector<8x33xf32>
    tpu.vector_store %arg9[%c0_16, %c0_17], %33 {strides = array<i32>} : memref<8x33xf32, #tpu.memory_space<vmem>>, vector<8x33xf32>,
    %c0_i32_18 = arith.constant 0 : i32
    %35 = arith.cmpi eq, %arg1, %c0_i32_18 : i32
    %36 = arith.extui %35 : i1 to i32
    %c0_i32_19 = arith.constant 0 : i32
    %37 = arith.cmpi ne, %36, %c0_i32_19 : i32
    scf.if %37 {
      %c0_20 = arith.constant 0 : index
      %c0_21 = arith.constant 0 : index
      %38 = vector.load %arg9[%c0_20, %c0_21] : memref<8x33xf32, #tpu.memory_space<vmem>>, vector<8x33xf32>
      %39 = vector.extract_strided_slice %38 {offsets = [0, 0], sizes = [8, 32], strides = [1, 1]} : vector<8x33xf32> to vector<8x32xf32>
      %40 = vector.extract_strided_slice %38 {offsets = [0, 32], sizes = [8, 1], strides = [1, 1]} : vector<8x33xf32> to vector<8x1xf32>
      %cst_22 = arith.constant 9.99999997E-7 : f32
      %41 = vector.broadcast %cst_22 : f32 to vector<8x1xf32>
      %42 = arith.maximumf %40, %41 : vector<8x1xf32>
      %43 = vector.broadcast %42 : vector<8x1xf32> to vector<8x32xf32>
      %44 = arith.divf %39, %43 : vector<8x32xf32>
      %45 = vector.extract_strided_slice %3 {offsets = [0, 0], sizes = [8, 32], strides = [1, 1]} : vector<8x33xf32> to vector<8x32xf32>
      %46 = tpu.concatenate %44, %45 in 1 : vector<8x32xf32>, vector<8x32xf32> -> vector<8x64xf32>
      %c0_23 = arith.constant 0 : index
      %c0_24 = arith.constant 0 : index
      %47 = vector.load %arg7[%c0_23, %c0_24] : memref<64x8xf32, #tpu.memory_space<vmem>>, vector<64x8xf32>
      %cst_25 = arith.constant dense<0.000000e+00> : vector<8x8xf32>
      %48 = tpu.matmul %46, %47, %cst_25 {dimension_numbers = #tpu.dot_dimension_numbers<[1], [0], [0], [1], [0, 0, 1, 1], [], []>} : vector<8x64xf32>, vector<64x8xf32>, vector<8x8xf32> -> vector<8x8xf32>
      %cst_26 = arith.constant 0.000000e+00 : f32
      %49 = vector.broadcast %cst_26 : f32 to vector<8x8xf32>
      %50 = arith.maximumf %48, %49 : vector<8x8xf32>
      %c0_27 = arith.constant 0 : index
      %c0_28 = arith.constant 0 : index
      %51 = vector.load %arg8[%c0_27, %c0_28] : memref<8x8xf32, #tpu.memory_space<vmem>>, vector<8x8xf32>
      tpu.vector_store %arg8[%c0_27, %c0_28], %50 {strides = array<i32>} : memref<8x8xf32, #tpu.memory_space<vmem>>, vector<8x8xf32>,
    } else {
    }
    return
  }
  func.func @transform_0(%arg0: i32, %arg1: i32) -> (i32, i32) {
    %c0_i32 = arith.constant 0 : i32
    %c0_i32_0 = arith.constant 0 : i32
    return %arg0, %c0_i32 : i32, i32
  }
  func.func @transform_1(%arg0: i32, %arg1: i32) -> (i32, i32) {
    %c0_i32 = arith.constant 0 : i32
    %c0_i32_0 = arith.constant 0 : i32
    return %arg1, %c0_i32 : i32, i32
  }
  func.func @transform_2(%arg0: i32, %arg1: i32) -> (i32, i32) {
    %c0_i32 = arith.constant 0 : i32
    %c0_i32_0 = arith.constant 0 : i32
    return %arg0, %c0_i32 : i32, i32
  }
  func.func @transform_3(%arg0: i32, %arg1: i32) -> (i32, i32) {
    %c0_i32 = arith.constant 0 : i32
    %c0_i32_0 = arith.constant 0 : i32
    return %c0_i32, %arg1 : i32, i32
  }
  func.func @transform_4(%arg0: i32, %arg1: i32) -> (i32, i32) {
    %c0_i32 = arith.constant 0 : i32
    return %arg0, %arg1 : i32, i32
  }
  func.func @transform_5(%arg0: i32, %arg1: i32) -> (i32, i32) {
    %c0_i32 = arith.constant 0 : i32
    %c0_i32_0 = arith.constant 0 : i32
    %c0_i32_1 = arith.constant 0 : i32
    return %c0_i32, %c0_i32_0 : i32, i32
  }
  func.func @transform_6(%arg0: i32, %arg1: i32) -> (i32, i32) {
    %c0_i32 = arith.constant 0 : i32
    %c0_i32_0 = arith.constant 0 : i32
    return %arg0, %c0_i32 : i32, i32
  }
}

</mosaic_0001>

<llo_original>
// kernel: uhg_graphsage_forward.5
$region0: #{uhg_graphsage_forward.5}
  #allocation0 [shape = 'u32[]', space=smem, size = 0x4, offset = 0x4, fixed_abs, tag = 'smem constant byte address 0x4 - core index']
  #allocation1 [shape = 'u32[144,128]{1,0:T(1,128)}', space=vmem, size = 0x12000, scoped, tag = 'internal scratch']
  #allocation2 [shape = 'f32[8,33]{1,0:T(8,128)}', space=vmem, size = 0x1000, scoped, tag = 'scratch operand']
  %s0 = inlined_call_operand.vmem [shape: f32[16,33], index: 0, kind: input, shape index: {}]
  %s1 = inlined_call_operand.vmem [shape: f32[16,33], index: 1, kind: input, shape index: {}]
  %s2 = inlined_call_operand.vmem [shape: f32[16,1], index: 2, kind: input, shape index: {}]
  %s3 = inlined_call_operand.vmem [shape: f32[1,16], index: 3, kind: input, shape index: {}]
  %s4 = inlined_call_operand.vmem [shape: bf16[16,16], index: 4, kind: input, shape index: {}]
  %s5 = inlined_call_operand.vmem [shape: f32[64,8], index: 5, kind: input, shape index: {}]
  %s6 = inlined_call_operand.vmem [shape: f32[16,8], index: 6, kind: output, shape index: {}]
  %s7 = sld [smem:[#allocation0]]
  $region65: #{uhg_graphsage_forward.5} parent=0
    _
  %s9 = ssub.s32 1, %s7
  %s10 = scalar_select 0, %s9, %s7
  loop: start=0, step=1, limit=4
  $region2: #{uhg_graphsage_forward.5} parent=0 // loop_pre_header
    _
  $region3: #{uhg_graphsage_forward.5} parent=0 // loop_header
    %s12 = sphi 0, %s16
    %p13 = scmp.ge.s32.totalorder %s12, 4
    %s19 = sphi 0, %s31
    %s20 = sphi 0, %s27
    %s21 = sphi 0, %s19
    %s22 = sphi 0, %s20
    %s23 = sphi 0, %s21
    %s24 = sphi 0, %s22
    %s34 = sphi 0, %s36
    %s37 = sphi 0, %s34
    %s38 = sphi 0, %s37
    %s54 = sphi 0, %s38
    %s60 = sphi 0, %s62
    %s63 = sphi 0, %s60
    %s64 = sphi 0, %s63
    %s80 = sphi 0, %s64
    %s86 = sphi 0, %s88
    %s89 = sphi 0, %s86
    %s90 = sphi 0, %s89
    %s106 = sphi 0, %s90
    %s112 = sphi 0, %s114
    %s115 = sphi 0, %s112
    %s116 = sphi 0, %s115
    %s132 = sphi 0, %s116
    %s140 = sphi 0, %s142
    %s143 = sphi 0, %s140
    %s144 = sphi 0, %s143
    %s160 = sphi 0, %s144
    %s164 = sphi 0, %s164
    %s166 = sphi 0, %s164
    %s167 = sphi 0, %s166
    %s181 = sphi 0, %s167
    %s187 = sphi 0, %s189
    %s190 = sphi 0, %s187
    %s191 = sphi 0, %s190
    %s207 = sphi 0, %s191
  $region4: #{uhg_graphsage_forward.5} parent=0 // loop_header_branch
    %15 = sbr.rel (%p13) target = $region8
  $region5: #{uhg_graphsage_forward.5} parent=0 // loop_body
    %s17 = ssub.s32 %s12, 1
    %s18 = ssub.s32 %s12, 2
    %s25 = sadd.s32 1, %s20
    %p26 = scmp.ge.s32.totalorder %s25, 1
    %s27 = scalar_select %p26, 0, %s25
    %s28 = sadd.s32 1, %s19
    %s29 = scalar_select %p26, %s28, %s19
    %p30 = scmp.ge.s32.totalorder %s29, 2
    %s31 = scalar_select %p30, 0, %s29
    %s32 = ssub.s32 %s19, %s31
    %p33 = scmp.eq.s32.totalorder %s32, 0
    %s35 = sadd.s32 %s34, 1
    %s36 = scalar_select %p33, %s34, %s35
    %p39 = pneg %p33
    %p40 = scmp.eq.s32.totalorder %s12, 1
    %p41 = por %p39, %p40
    %p42 = scmp.ne.s32.totalorder %s34, %s37
    %p43 = scmp.eq.s32.totalorder %s12, 0
    %p44 = por %p42, %p43
    %p45 = scmp.ne.s32.totalorder %s34, %s37
    %p46 = scmp.eq.s32.totalorder %s17, 1
    %p47 = por %p45, %p46
    %p48 = scmp.ne.s32.totalorder %s37, %s38
    %p49 = scmp.eq.s32.totalorder %s17, 0
    %p50 = por %p48, %p49
    %p51 = scmp.ne.s32.totalorder %s37, %s38
    %p52 = scmp.eq.s32.totalorder %s18, 1
    %p53 = por %p51, %p52
    %p55 = scmp.ne.s32.totalorder %s38, %s54
    %p56 = scmp.eq.s32.totalorder %s18, 0
    %p57 = por %p55, %p56
    %s58 = ssub.s32 %s20, %s27
    %p59 = scmp.eq.s32.totalorder %s58, 0
    %s61 = sadd.s32 %s60, 1
    %s62 = scalar_select %p59, %s60, %s61
    %p65 = pneg %p59
    %p66 = scmp.eq.s32.totalorder %s12, 1
    %p67 = por %p65, %p66
    %p68 = scmp.ne.s32.totalorder %s60, %s63
    %p69 = scmp.eq.s32.totalorder %s12, 0
    %p70 = por %p68, %p69
    %p71 = scmp.ne.s32.totalorder %s60, %s63
    %p72 = scmp.eq.s32.totalorder %s17, 1
    %p73 = por %p71, %p72
    %p74 = scmp.ne.s32.totalorder %s63, %s64
    %p75 = scmp.eq.s32.totalorder %s17, 0
    %p76 = por %p74, %p75
    %p77 = scmp.ne.s32.totalorder %s63, %s64
    %p78 = scmp.eq.s32.totalorder %s18, 1
    %p79 = por %p77, %p78
    %p81 = scmp.ne.s32.totalorder %s64, %s80
    %p82 = scmp.eq.s32.totalorder %s18, 0
    %p83 = por %p81, %p82
    %s84 = ssub.s32 %s19, %s31
    %p85 = scmp.eq.s32.totalorder %s84, 0
    %s87 = sadd.s32 %s86, 1
    %s88 = scalar_select %p85, %s86, %s87
    %p91 = pneg %p85
    %p92 = scmp.eq.s32.totalorder %s12, 1
    %p93 = por %p91, %p92
    %p94 = scmp.ne.s32.totalorder %s86, %s89
    %p95 = scmp.eq.s32.totalorder %s12, 0
    %p96 = por %p94, %p95
    %p97 = scmp.ne.s32.totalorder %s86, %s89
    %p98 = scmp.eq.s32.totalorder %s17, 1
    %p99 = por %p97, %p98
    %p100 = scmp.ne.s32.totalorder %s89, %s90
    %p101 = scmp.eq.s32.totalorder %s17, 0
    %p102 = por %p100, %p101
    %p103 = scmp.ne.s32.totalorder %s89, %s90
    %p104 = scmp.eq.s32.totalorder %s18, 1
    %p105 = por %p103, %p104
    %p107 = scmp.ne.s32.totalorder %s90, %s106
    %p108 = scmp.eq.s32.totalorder %s18, 0
    %p109 = por %p107, %p108
    %s110 = ssub.s32 %s20, %s27
    %p111 = scmp.eq.s32.totalorder %s110, 0
    %s113 = sadd.s32 %s112, 1
    %s114 = scalar_select %p111, %s112, %s113
    %p117 = pneg %p111
    %p118 = scmp.eq.s32.totalorder %s12, 1
    %p119 = por %p117, %p118
    %p120 = scmp.ne.s32.totalorder %s112, %s115
    %p121 = scmp.eq.s32.totalorder %s12, 0
    %p122 = por %p120, %p121
    %p123 = scmp.ne.s32.totalorder %s112, %s115
    %p124 = scmp.eq.s32.totalorder %s17, 1
    %p125 = por %p123, %p124
    %p126 = scmp.ne.s32.totalorder %s115, %s116
    %p127 = scmp.eq.s32.totalorder %s17, 0
    %p128 = por %p126, %p127
    %p129 = scmp.ne.s32.totalorder %s115, %s116
    %p130 = scmp.eq.s32.totalorder %s18, 1
    %p131 = por %p129, %p130
    %p133 = scmp.ne.s32.totalorder %s116, %s132
    %p134 = scmp.eq.s32.totalorder %s18, 0
    %p135 = por %p133, %p134
    %s136 = ssub.s32 %s19, %s31
    %s137 = ssub.s32 %s20, %s27
    %s138 = sor.u32 %s136, %s137
    %p139 = scmp.eq.s32.totalorder %s138, 0
    %s141 = sadd.s32 %s140, 1
    %s142 = scalar_select %p139, %s140, %s141
    %p145 = pneg %p139
    %p146 = scmp.eq.s32.totalorder %s12, 1
    %p147 = por %p145, %p146
    %p148 = scmp.ne.s32.totalorder %s140, %s143
    %p149 = scmp.eq.s32.totalorder %s12, 0
    %p150 = por %p148, %p149
    %p151 = scmp.ne.s32.totalorder %s140, %s143
    %p152 = scmp.eq.s32.totalorder %s17, 1
    %p153 = por %p151, %p152
    %p154 = scmp.ne.s32.totalorder %s143, %s144
    %p155 = scmp.eq.s32.totalorder %s17, 0
    %p156 = por %p154, %p155
    %p157 = scmp.ne.s32.totalorder %s143, %s144
    %p158 = scmp.eq.s32.totalorder %s18, 1
    %p159 = por %p157, %p158
    %p161 = scmp.ne.s32.totalorder %s144, %s160
    %p162 = scmp.eq.s32.totalorder %s18, 0
    %p163 = por %p161, %p162
    %s165 = sadd.s32 %s164, 1
    %p168 = scmp.eq.s32.totalorder %s12, 1
    %p169 = scmp.ne.s32.totalorder %s164, %s166
    %p170 = scmp.eq.s32.totalorder %s12, 0
    %p171 = por %p169, %p170
    %p172 = scmp.ne.s32.totalorder %s164, %s166
    %p173 = scmp.eq.s32.totalorder %s17, 1
    %p174 = por %p172, %p173
    %p175 = scmp.ne.s32.totalorder %s166, %s167
    %p176 = scmp.eq.s32.totalorder %s17, 0
    %p177 = por %p175, %p176
    %p178 = scmp.ne.s32.totalorder %s166, %s167
    %p179 = scmp.eq.s32.totalorder %s18, 1
    %p180 = por %p178, %p179
    %p182 = scmp.ne.s32.totalorder %s167, %s181
    %p183 = scmp.eq.s32.totalorder %s18, 0
    %p184 = por %p182, %p183
    %s185 = ssub.s32 %s19, %s31
    %p186 = scmp.eq.s32.totalorder %s185, 0
    %s188 = sadd.s32 %s187, 1
    %s189 = scalar_select %p186, %s187, %s188
    %p192 = pneg %p186
    %p193 = scmp.eq.s32.totalorder %s12, 1
    %p194 = por %p192, %p193
    %p195 = scmp.ne.s32.totalorder %s187, %s190
    %p196 = scmp.eq.s32.totalorder %s12, 0
    %p197 = por %p195, %p196
    %p198 = scmp.ne.s32.totalorder %s187, %s190
    %p199 = scmp.eq.s32.totalorder %s17, 1
    %p200 = por %p198, %p199
    %p201 = scmp.ne.s32.totalorder %s190, %s191
    %p202 = scmp.eq.s32.totalorder %s17, 0
    %p203 = por %p201, %p202
    %p204 = scmp.ne.s32.totalorder %s190, %s191
    %p205 = scmp.eq.s32.totalorder %s18, 1
    %p206 = por %p204, %p205
    %p208 = scmp.ne.s32.totalorder %s191, %s207
    %p209 = scmp.eq.s32.totalorder %s18, 0
    %p210 = por %p208, %p209
    %p211 = scmp.le.s32.totalorder 1, %s12
    %p212 = scmp.lt.s32.totalorder %s12, 3
    %p213 = pnand %p211, %p212
    %p214 = pneg %p213
    // Predicated region
    $region9: #{uhg_graphsage_forward.5} parent=5 // pred_check
      _
    $region10: #{uhg_graphsage_forward.5} parent=5 // pred_check_branch
      %216 = sbr.rel (%p213) target = $region12
    $region11: #{uhg_graphsage_forward.5} parent=5 // pred_region
      %s217 = ssub.s32 %s12, 1
      // Predicated region
      $region13: #{uhg_graphsage_forward.5} parent=11 // pred_check
        %p218 = pneg %p76
      $region14: #{uhg_graphsage_forward.5} parent=11 // pred_check_branch
        %220 = sbr.rel (%p218) target = $region16
      $region15: #{uhg_graphsage_forward.5} parent=11 // pred_region
        %s221 = smul.u32 2, %s22
        %p222 = scmp.lt.s32.totalorder %s221, 1
        %s223 = scalar_select %p222, %s221, 1
        %s224 = smul.addr %s223, 8
        %s225 = scalar_lea.vmem %s1, %s224
        %s226 = smul.u32 2, %s22
      $region16: #{uhg_graphsage_forward.5} parent=11 // pred_fallthru
        _
      // Predicated region
      $region17: #{uhg_graphsage_forward.5} parent=11 // pred_check
        %p227 = pneg %p128
      $region18: #{uhg_graphsage_forward.5} parent=11 // pred_check_branch
        %229 = sbr.rel (%p227) target = $region20
      $region19: #{uhg_graphsage_forward.5} parent=11 // pred_region
        %p230 = scmp.lt.s32.totalorder %s22, 0
        %s231 = scalar_select %p230, %s22, 0
        %s232 = scalar_lea.vmem %s3, %s231
      $region20: #{uhg_graphsage_forward.5} parent=11 // pred_fallthru
        _
      // Predicated region
      $region21: #{uhg_graphsage_forward.5} parent=11 // pred_check
        %p233 = pneg %p177
      $region22: #{uhg_graphsage_forward.5} parent=11 // pred_check_branch
        %235 = sbr.rel (%p233) target = $region24
      $region23: #{uhg_graphsage_forward.5} parent=11 // pred_region
        _
      $region24: #{uhg_graphsage_forward.5} parent=11 // pred_fallthru
        _
    $region12: #{uhg_graphsage_forward.5} parent=5 // pred_fallthru
      _
    %p236 = scmp.lt.s32.totalorder %s12, 2
    // Predicated region
    $region25: #{uhg_graphsage_forward.5} parent=5 // pred_check
      %p237 = pneg %p236
    $region26: #{uhg_graphsage_forward.5} parent=5 // pred_check_branch
      %239 = sbr.rel (%p237) target = $region28
    $region27: #{uhg_graphsage_forward.5} parent=5 // pred_region
      // Predicated region
      $region29: #{uhg_graphsage_forward.5} parent=27 // pred_check
        %p240 = pneg %p44
      $region30: #{uhg_graphsage_forward.5} parent=27 // pred_check_branch
        %242 = sbr.rel (%p240) target = $region32
      $region31: #{uhg_graphsage_forward.5} parent=27 // pred_region
        %p243 = scmp.lt.s32.totalorder %s19, 1
        %s244 = scalar_select %p243, %s19, 1
        %s245 = smul.addr %s244, 8
        %s246 = scalar_lea.vmem %s0, %s245
      $region32: #{uhg_graphsage_forward.5} parent=27 // pred_fallthru
        _
      // Predicated region
      $region33: #{uhg_graphsage_forward.5} parent=27 // pred_check
        %p247 = pneg %p96
      $region34: #{uhg_graphsage_forward.5} parent=27 // pred_check_branch
        %249 = sbr.rel (%p247) target = $region36
      $region35: #{uhg_graphsage_forward.5} parent=27 // pred_region
        %p250 = scmp.lt.s32.totalorder %s19, 1
        %s251 = scalar_select %p250, %s19, 1
        %s252 = smul.addr %s251, 8
        %s253 = scalar_lea.vmem %s2, %s252
      $region36: #{uhg_graphsage_forward.5} parent=27 // pred_fallthru
        _
      // Predicated region
      $region37: #{uhg_graphsage_forward.5} parent=27 // pred_check
        %p254 = pneg %p150
      $region38: #{uhg_graphsage_forward.5} parent=27 // pred_check_branch
        %256 = sbr.rel (%p254) target = $region40
      $region39: #{uhg_graphsage_forward.5} parent=27 // pred_region
        %p257 = scmp.lt.s32.totalorder %s19, 1
        %s258 = scalar_select %p257, %s19, 1
        %p259 = scmp.lt.s32.totalorder %s20, 0
        %s260 = scalar_select %p259, %s20, 0
        %s261 = sadd.s32 %s260, %s258
        %s262 = smul.addr %s261, 4
        %s263 = scalar_lea.vmem %s4, %s262
      $region40: #{uhg_graphsage_forward.5} parent=27 // pred_fallthru
        _
    $region28: #{uhg_graphsage_forward.5} parent=5 // pred_fallthru
      _
    %p264 = scmp.le.s32.totalorder 1, %s12
    %p265 = scmp.lt.s32.totalorder %s12, 3
    %p266 = pnand %p264, %p265
    %p267 = pneg %p266
    // Predicated region
    $region41: #{uhg_graphsage_forward.5} parent=5 // pred_check
      _
    $region42: #{uhg_graphsage_forward.5} parent=5 // pred_check_branch
      %269 = sbr.rel (%p266) target = $region44
    $region43: #{uhg_graphsage_forward.5} parent=5 // pred_region
      %s270 = ssub.s32 %s12, 1
      %p271 = scmp.lt.s32.totalorder %s21, 1
      %s272 = scalar_select %p271, %s21, 1
      %s273 = smul.addr %s272, 8
      %s274 = scalar_lea.vmem %s0, %s273
      %p275 = pneg %p50
      %p276 = pneg %p47
      %s277 = smul.u32 2, %s22
      %p278 = scmp.lt.s32.totalorder %s277, 1
      %s279 = scalar_select %p278, %s277, 1
      %s280 = smul.addr %s279, 8
      %s281 = scalar_lea.vmem %s1, %s280
      %p282 = pneg %p76
      %p283 = pneg %p73
      %p284 = scmp.lt.s32.totalorder %s21, 1
      %s285 = scalar_select %p284, %s21, 1
      %s286 = smul.addr %s285, 8
      %s287 = scalar_lea.vmem %s2, %s286
      %p288 = pneg %p102
      %p289 = pneg %p99
      %p290 = scmp.lt.s32.totalorder %s22, 0
      %s291 = scalar_select %p290, %s22, 0
      %s292 = scalar_lea.vmem %s3, %s291
      %p293 = pneg %p128
      %p294 = pneg %p125
      %p295 = scmp.lt.s32.totalorder %s21, 1
      %s296 = scalar_select %p295, %s21, 1
      %p297 = scmp.lt.s32.totalorder %s22, 0
      %s298 = scalar_select %p297, %s22, 0
      %s299 = sadd.s32 %s298, %s296
      %s300 = smul.addr %s299, 4
      %s301 = scalar_lea.vmem %s4, %s300
      %p302 = pneg %p156
      %p303 = pneg %p153
      %p304 = pneg %p177
      %p305 = pneg %p174
      %p306 = pneg %p203
      %p307 = pneg %p200
      %p308 = scmp.lt.s32.totalorder %s21, 1
      %s309 = scalar_select %p308, %s21, 1
      %s310 = smul.addr %s309, 8
      %s311 = scalar_lea.vmem %s6, %s310
      %p312 = scmp.lt.s32.totalorder %s21, 1
      %s313 = scalar_select %p312, %s21, 1
      %s314 = smul.addr %s313, 8
      %s315 = scalar_lea.vmem %s0, %s314
      %s316 = smul.u32 2, %s22
      %p317 = scmp.lt.s32.totalorder %s316, 1
      %s318 = scalar_select %p317, %s316, 1
      %s319 = smul.addr %s318, 8
      %s320 = scalar_lea.vmem %s1, %s319
      %s321 = smul.u32 2, %s22
      %p322 = scmp.lt.s32.totalorder %s21, 1
      %s323 = scalar_select %p322, %s21, 1
      %s324 = smul.addr %s323, 8
      %s325 = scalar_lea.vmem %s2, %s324
      %p326 = scmp.lt.s32.totalorder %s22, 0
      %s327 = scalar_select %p326, %s22, 0
      %s328 = scalar_lea.vmem %s3, %s327
      %p329 = scmp.lt.s32.totalorder %s21, 1
      %s330 = scalar_select %p329, %s21, 1
      %p331 = scmp.lt.s32.totalorder %s22, 0
      %s332 = scalar_select %p331, %s22, 0
      %s333 = sadd.s32 %s332, %s330
      %s334 = smul.addr %s333, 4
      %s335 = scalar_lea.vmem %s4, %s334
      %p336 = scmp.lt.s32.totalorder %s21, 1
      %s337 = scalar_select %p336, %s21, 1
      %s338 = smul.addr %s337, 8
      %s339 = scalar_lea.vmem %s6, %s338
      %p341 = scmp.eq.s32.totalorder %s22, 0
      // Predicated region
      $region45: #{uhg_graphsage_forward.5} parent=43 // pred_check
        %p342 = pneg %p341
      $region46: #{uhg_graphsage_forward.5} parent=43 // pred_check_branch
        %344 = sbr.rel (%p342) target = $region48
      $region47: #{uhg_graphsage_forward.5} parent=43 // pred_region
        %vm345 = vcmask 269312
        %346 = vst.msk [vmem:[#allocation2] sm:$0xff] %vm345, 0.0
      $region48: #{uhg_graphsage_forward.5} parent=43 // pred_fallthru
        _
      %v347 = vld [vmem:[%s315] sm:$0xff]
      %v348 = vld [vmem:[%s320] sm:$0xff]
      %v349 = vld [vmem:[%s320 + $0x8] sm:$0xff]
      %v350 = vpack.c.bf16 %v347, %v347
      %v351 = vpack.c.bf16 %v349, %v348
      %vm352 = vcmask 269312
      %v354 = vsel %vm352, %v350, 0
      %v357 = vsel %vm352, %v351, 0
      %359 = vmatprep.subr.bf16.mxu0 0
      %360 = vmatpush1.bf16.xpose.msra.mxu0 %v357
      %361 = vmatprep.subr.bf16.mxu0 0
      %362 = vmatpush1.bf16.xpose.msra.mxu0 0
      %363 = vmatprep.subr.bf16.mxu0 0
      %364 = vmatpush1.bf16.xpose.msra.mxu0 0
      %365 = vmatprep.subr.bf16.mxu0 0
      %366 = vmatpush1.bf16.xpose.msra.mxu0 0
      %367 = vmatprep.subr.bf16.mxu0 0
      %368 = vmatpush1.bf16.xpose.msra.mxu0 0
      %369 = vmatprep.subr.bf16.mxu0 0
      %370 = vmatpush1.bf16.xpose.msra.mxu0 0
      %371 = vmatprep.subr.bf16.mxu0 0
      %372 = vmatpush1.bf16.xpose.msra.mxu0 0
      %373 = vmatprep.subr.bf16.mxu0 0
      %374 = vmatpush1.bf16.xpose.msra.mxu0 0
      %375 = vmatprep.subr.bf16.mxu0 0
      %376 = vmatpush1.bf16.xpose.msra.mxu0 0
      %377 = vmatprep.subr.bf16.mxu0 0
      %378 = vmatpush1.bf16.xpose.msra.mxu0 0
      %379 = vmatprep.subr.bf16.mxu0 0
      %380 = vmatpush1.bf16.xpose.msra.mxu0 0
      %381 = vmatprep.subr.bf16.mxu0 0
      %382 = vmatpush1.bf16.xpose.msra.mxu0 0
      %383 = vmatprep.subr.bf16.mxu0 0
      %384 = vmatpush1.bf16.xpose.msra.mxu0 0
      %385 = vmatprep.subr.bf16.mxu0 0
      %386 = vmatpush1.bf16.xpose.msra.mxu0 0
      %387 = vmatprep.subr.bf16.mxu0 0
      %388 = vmatpush1.bf16.xpose.msra.mxu0 0
      %389 = vmatprep.subr.bf16.mxu0 0
      %390 = vmatpush1.bf16.xpose.msra.mxu0 0
      %391 = vmatprep.mubr.bf16.mxu0 0
      %392 = vmatmul.mubr.bf16.gmra.mrb[0].mxu0 %v354
      %v393 = vpop.f32.mrb[0].mxu0
      %v394 = vadd.f32 0.0, %v393
      %v395 = vpop.f32.mrb[0].mxu0
      %v396 = vpop.f32.mrb[0].mxu0
      %v397 = vpop.f32.mrb[0].mxu0
      %398 = vdwg.mxu0
      %v399 = vmul.f32 %v394, %v394
      %v400 = vld [vmem:[%s325] sm:$0xff]
      %402 = vset.pattern.permute.xlu0 0
      %403 = vperm.xlu0 %402, %v400
      %v404 = vpop.permute.xlu0 %403
      %v406 = vmul.f32 %v399, %v404
      %v407 = vld [vmem:[%s328] sm:$0x1]
      %v409 = vlaneseq
      %v410 = vshrl.u32 %v409, 7
      %v411 = vsub.s32 0, %v410
      %v412 = vrot.slane %v407, %v411
      %v414 = vmul.f32 %v406, %v412
      %v415 = vsub.f32 1.0, %v414
      %v416 = vmin.f32 %v415, 80.0
      %v417 = vmul.f32 %v416, 1.442695
      %v418 = vpow.pop %v417
      %v419 = vld [vmem:[%s335] sm:$0xf]
      %v420 = vpack.c.bf16 %v418, %v418
      %v421 = vmul.bf16 %v419, %v420
      %v422 = vlaneseq
      %v423 = vand.u32 %v422, 127
      %vm424 = vcmp.eq.s32.totalorder %v423, 32
      %v425 = vsel %vm424, 1, 0
      %vm426 = vcmp.eq.s32.totalorder %v425, 1
      %v427 = vsel %vm426, 1.0, %v348
      %v428 = vsel %vm426, 1.0, %v349
      %v429 = vpack.c.bf16 %v428, %v427
      %v430 = vld [vmem:[#allocation2] sm:$0xff]
      %vm431 = vcmask 130048
      %v433 = vsel %vm431, %v421, 0
      %435 = vmatprep.subr.bf16.mxu0 0
      %436 = vmatpush1.bf16.msra.mxu0 %v429
      %437 = vmatprep.subr.bf16.mxu0 0
      %438 = vmatpush1.bf16.msra.mxu0 0
      %439 = vmatprep.subr.bf16.mxu0 0
      %440 = vmatpush1.bf16.msra.mxu0 0
      %441 = vmatprep.subr.bf16.mxu0 0
      %442 = vmatpush1.bf16.msra.mxu0 0
      %443 = vmatprep.subr.bf16.mxu0 0
      %444 = vmatpush1.bf16.msra.mxu0 0
      %445 = vmatprep.subr.bf16.mxu0 0
      %446 = vmatpush1.bf16.msra.mxu0 0
      %447 = vmatprep.subr.bf16.mxu0 0
      %448 = vmatpush1.bf16.msra.mxu0 0
      %449 = vmatprep.subr.bf16.mxu0 0
      %450 = vmatpush1.bf16.msra.mxu0 0
      %451 = vmatprep.subr.bf16.mxu0 0
      %452 = vmatpush1.bf16.msra.mxu0 0
      %453 = vmatprep.subr.bf16.mxu0 0
      %454 = vmatpush1.bf16.msra.mxu0 0
      %455 = vmatprep.subr.bf16.mxu0 0
      %456 = vmatpush1.bf16.msra.mxu0 0
      %457 = vmatprep.subr.bf16.mxu0 0
      %458 = vmatpush1.bf16.msra.mxu0 0
      %459 = vmatprep.subr.bf16.mxu0 0
      %460 = vmatpush1.bf16.msra.mxu0 0
      %461 = vmatprep.subr.bf16.mxu0 0
      %462 = vmatpush1.bf16.msra.mxu0 0
      %463 = vmatprep.subr.bf16.mxu0 0
      %464 = vmatpush1.bf16.msra.mxu0 0
      %465 = vmatprep.subr.bf16.mxu0 0
      %466 = vmatpush1.bf16.msra.mxu0 0
      %467 = vmatprep.mubr.bf16.mxu0 0
      %468 = vmatmul.mubr.bf16.gmra.mrb[0].mxu0 %v433
      %v469 = vpop.f32.mrb[0].mxu0
      %v470 = vadd.f32 0.0, %v469
      %v471 = vpop.f32.mrb[0].mxu0
      %v472 = vpop.f32.mrb[0].mxu0
      %v473 = vpop.f32.mrb[0].mxu0
      %474 = vdwg.mxu0
      %v475 = vadd.f32 %v430, %v470
      %476 = vst.msk [vmem:[#allocation2] sm:$0xff] %vm352, %v475
      // Predicated region
      $region49: #{uhg_graphsage_forward.5} parent=43 // pred_check
        %p477 = pneg %p341
      $region50: #{uhg_graphsage_forward.5} parent=43 // pred_check_branch
        %479 = sbr.rel (%p477) target = $region52
      $region51: #{uhg_graphsage_forward.5} parent=43 // pred_region
        %v480 = vld [vmem:[#allocation2] sm:$0xff]
        %v481 = vmax.f32 %v480, 1e-06
        %483 = vset.pattern.permute.xlu0 32
        %484 = vperm.xlu0 %483, %v481
        %v485 = vpop.permute.xlu0 %484
        %v487 = vrcp.pop %v485
        %v488 = vmul.f32 %v480, %v487
        %490 = vrot.lane.b32.xlu0 %v347, 32
        %v491 = vpop.permute.xlu0 %490
        %vm493 = vcmask 261120
        %v494 = vsel %vm493, %v488, %v491
        %v495 = vld [vmem:[%s5] sm:$0xff]
        %v496 = vld [vmem:[%s5 + $0x8] sm:$0xff]
        %v497 = vld [vmem:[%s5 + $0x10] sm:$0xff]
        %v498 = vld [vmem:[%s5 + $0x18] sm:$0xff]
        %v499 = vld [vmem:[%s5 + $0x20] sm:$0xff]
        %v500 = vld [vmem:[%s5 + $0x28] sm:$0xff]
        %v501 = vld [vmem:[%s5 + $0x30] sm:$0xff]
        %v502 = vld [vmem:[%s5 + $0x38] sm:$0xff]
        %vm503 = vcmask 523264
        %v505 = vsel %vm503, %v494, 0
        %507 = vmatprep.subr.mxu0 0.0
        %508 = vmatpush1.msra.mxu0 %v495
        %509 = vmatprep.subr.mxu0 0.0
        %510 = vmatpush1.msra.mxu0 %v496
        %511 = vmatprep.subr.mxu0 0.0
        %512 = vmatpush1.msra.mxu0 %v497
        %513 = vmatprep.subr.mxu0 0.0
        %514 = vmatpush1.msra.mxu0 %v498
        %515 = vmatprep.subr.mxu0 0.0
        %516 = vmatpush1.msra.mxu0 %v499
        %517 = vmatprep.subr.mxu0 0.0
        %518 = vmatpush1.msra.mxu0 %v500
        %519 = vmatprep.subr.mxu0 0.0
        %520 = vmatpush1.msra.mxu0 %v501
        %521 = vmatprep.subr.mxu0 0.0
        %522 = vmatpush1.msra.mxu0 %v502
        %523 = vmatprep.subr.mxu0 0.0
        %524 = vmatpush1.msra.mxu0 0.0
        %525 = vmatprep.subr.mxu0 0.0
        %526 = vmatpush1.msra.mxu0 0.0
        %527 = vmatprep.subr.mxu0 0.0
        %528 = vmatpush1.msra.mxu0 0.0
        %529 = vmatprep.subr.mxu0 0.0
        %530 = vmatpush1.msra.mxu0 0.0
        %531 = vmatprep.subr.mxu0 0.0
        %532 = vmatpush1.msra.mxu0 0.0
        %533 = vmatprep.subr.mxu0 0.0
        %534 = vmatpush1.msra.mxu0 0.0
        %535 = vmatprep.subr.mxu0 0.0
        %536 = vmatpush1.msra.mxu0 0.0
        %537 = vmatprep.subr.mxu0 0.0
        %538 = vmatpush1.msra.mxu0 0.0
        %539 = vmatprep.subr.mxu0 0.0
        %540 = vmatpush1.msra.mxu0 0.0
        %541 = vmatprep.subr.mxu0 0.0
        %542 = vmatpush1.msra.mxu0 0.0
        %543 = vmatprep.subr.mxu0 0.0
        %544 = vmatpush1.msra.mxu0 0.0
        %545 = vmatprep.subr.mxu0 0.0
        %546 = vmatpush1.msra.mxu0 0.0
        %547 = vmatprep.subr.mxu0 0.0
        %548 = vmatpush1.msra.mxu0 0.0
        %549 = vmatprep.subr.mxu0 0.0
        %550 = vmatpush1.msra.mxu0 0.0
        %551 = vmatprep.subr.mxu0 0.0
        %552 = vmatpush1.msra.mxu0 0.0
        %553 = vmatprep.subr.mxu0 0.0
        %554 = vmatpush1.msra.mxu0 0.0
        %555 = vmatprep.subr.mxu0 0.0
        %556 = vmatpush1.msra.mxu0 0.0
        %557 = vmatprep.subr.mxu0 0.0
        %558 = vmatpush1.msra.mxu0 0.0
        %559 = vmatprep.subr.mxu0 0.0
        %560 = vmatpush1.msra.mxu0 0.0
        %561 = vmatprep.subr.mxu0 0.0
        %562 = vmatpush1.msra.mxu0 0.0
        %563 = vmatprep.subr.mxu0 0.0
        %564 = vmatpush1.msra.mxu0 0.0
        %565 = vmatprep.subr.mxu0 0.0
        %566 = vmatpush1.msra.mxu0 0.0
        %567 = vmatprep.subr.mxu0 0.0
        %568 = vmatpush1.msra.mxu0 0.0
        %569 = vmatprep.subr.mxu0 0.0
        %570 = vmatpush1.msra.mxu0 0.0
        %571 = vmatprep.mubr.f32.mxu0 0.0
        %572 = vmatmul.mubr.f32.gmra.mrb[0].mxu0 %v505
        %v573 = vpop.f32.mrb[0].mxu0
        %v574 = vadd.f32 0.0, %v573
        %v575 = vpop.f32.mrb[0].mxu0
        %576 = vdwg.mxu0
        %v577 = vmax.f32 %v574, 0.0
        %vm578 = vcmask 64512
        %579 = vst.msk [vmem:[%s339] sm:$0xff] %vm578, %v577
      $region52: #{uhg_graphsage_forward.5} parent=43 // pred_fallthru
        _
      %p580 = scmp.lt.s32.totalorder %s21, 1
      %s581 = scalar_select %p580, %s21, 1
      %s582 = smul.addr %s581, 8
      %s583 = scalar_lea.vmem %s6, %s582
      // Predicated region
      $region53: #{uhg_graphsage_forward.5} parent=43 // pred_check
        %p584 = pneg %p200
      $region54: #{uhg_graphsage_forward.5} parent=43 // pred_check_branch
        %586 = sbr.rel (%p584) target = $region56
      $region55: #{uhg_graphsage_forward.5} parent=43 // pred_region
        _
      $region56: #{uhg_graphsage_forward.5} parent=43 // pred_fallthru
        _
    $region44: #{uhg_graphsage_forward.5} parent=5 // pred_fallthru
      _
    %p587 = scmp.le.s32.totalorder 2, %s12
    // Predicated region
    $region57: #{uhg_graphsage_forward.5} parent=5 // pred_check
      %p588 = pneg %p587
    $region58: #{uhg_graphsage_forward.5} parent=5 // pred_check_branch
      %590 = sbr.rel (%p588) target = $region60
    $region59: #{uhg_graphsage_forward.5} parent=5 // pred_region
      %s591 = ssub.s32 %s12, 2
      // Predicated region
      $region61: #{uhg_graphsage_forward.5} parent=59 // pred_check
        %p592 = pneg %p206
      $region62: #{uhg_graphsage_forward.5} parent=59 // pred_check_branch
        %594 = sbr.rel (%p592) target = $region64
      $region63: #{uhg_graphsage_forward.5} parent=59 // pred_region
        %p595 = scmp.lt.s32.totalorder %s23, 1
        %s596 = scalar_select %p595, %s23, 1
        %s597 = smul.addr %s596, 8
        %s598 = scalar_lea.vmem %s6, %s597
      $region64: #{uhg_graphsage_forward.5} parent=59 // pred_fallthru
        _
    $region60: #{uhg_graphsage_forward.5} parent=5 // pred_fallthru
      _
  $region6: #{uhg_graphsage_forward.5} parent=0 // loop_footer
    %s16 = sadd.s32 1, %s12
  $region7: #{uhg_graphsage_forward.5} parent=0 // loop_footer_branch
    %11 = sbr.rel target = $region3
  $region8: #{uhg_graphsage_forward.5} parent=0 // loop_exit
    _

// kernel: uhg_graphsage_forward.4
$region0: #{uhg_graphsage_forward.4}
  #allocation0 [shape = 'u32[]', space=smem, size = 0x4, offset = 0x4, fixed_abs, tag = 'smem constant byte address 0x4 - core index']
  #allocation1 [shape = 'u32[144,128]{1,0:T(1,128)}', space=vmem, size = 0x12000, scoped, tag = 'internal scratch']
  #allocation2 [shape = 'f32[8,33]{1,0:T(8,128)}', space=vmem, size = 0x1000, scoped, tag = 'scratch operand']
  %s0 = inlined_call_operand.vmem [shape: f32[16,33], index: 0, kind: input, shape index: {}]
  %s1 = inlined_call_operand.vmem [shape: f32[16,33], index: 1, kind: input, shape index: {}]
  %s2 = inlined_call_operand.vmem [shape: f32[16,1], index: 2, kind: input, shape index: {}]
  %s3 = inlined_call_operand.vmem [shape: f32[1,16], index: 3, kind: input, shape index: {}]
  %s4 = inlined_call_operand.vmem [shape: bf16[16,16], index: 4, kind: input, shape index: {}]
  %s5 = inlined_call_operand.vmem [shape: f32[64,32], index: 5, kind: input, shape index: {}]
  %s6 = inlined_call_operand.vmem [shape: f32[16,32], index: 6, kind: output, shape index: {}]
  %s7 = sld [smem:[#allocation0]]
  $region65: #{uhg_graphsage_forward.4} parent=0
    _
  %s9 = ssub.s32 1, %s7
  %s10 = scalar_select 0, %s9, %s7
  loop: start=0, step=1, limit=4
  $region2: #{uhg_graphsage_forward.4} parent=0 // loop_pre_header
    _
  $region3: #{uhg_graphsage_forward.4} parent=0 // loop_header
    %s12 = sphi 0, %s16
    %p13 = scmp.ge.s32.totalorder %s12, 4
    %s19 = sphi 0, %s31
    %s20 = sphi 0, %s27
    %s21 = sphi 0, %s19
    %s22 = sphi 0, %s20
    %s23 = sphi 0, %s21
    %s24 = sphi 0, %s22
    %s34 = sphi 0, %s36
    %s37 = sphi 0, %s34
    %s38 = sphi 0, %s37
    %s54 = sphi 0, %s38
    %s60 = sphi 0, %s62
    %s63 = sphi 0, %s60
    %s64 = sphi 0, %s63
    %s80 = sphi 0, %s64
    %s86 = sphi 0, %s88
    %s89 = sphi 0, %s86
    %s90 = sphi 0, %s89
    %s106 = sphi 0, %s90
    %s112 = sphi 0, %s114
    %s115 = sphi 0, %s112
    %s116 = sphi 0, %s115
    %s132 = sphi 0, %s116
    %s140 = sphi 0, %s142
    %s143 = sphi 0, %s140
    %s144 = sphi 0, %s143
    %s160 = sphi 0, %s144
    %s164 = sphi 0, %s164
    %s166 = sphi 0, %s164
    %s167 = sphi 0, %s166
    %s181 = sphi 0, %s167
    %s187 = sphi 0, %s189
    %s190 = sphi 0, %s187
    %s191 = sphi 0, %s190
    %s207 = sphi 0, %s191
  $region4: #{uhg_graphsage_forward.4} parent=0 // loop_header_branch
    %15 = sbr.rel (%p13) target = $region8
  $region5: #{uhg_graphsage_forward.4} parent=0 // loop_body
    %s17 = ssub.s32 %s12, 1
    %s18 = ssub.s32 %s12, 2
    %s25 = sadd.s32 1, %s20
    %p26 = scmp.ge.s32.totalorder %s25, 1
    %s27 = scalar_select %p26, 0, %s25
    %s28 = sadd.s32 1, %s19
    %s29 = scalar_select %p26, %s28, %s19
    %p30 = scmp.ge.s32.totalorder %s29, 2
    %s31 = scalar_select %p30, 0, %s29
    %s32 = ssub.s32 %s19, %s31
    %p33 = scmp.eq.s32.totalorder %s32, 0
    %s35 = sadd.s32 %s34, 1
    %s36 = scalar_select %p33, %s34, %s35
    %p39 = pneg %p33
    %p40 = scmp.eq.s32.totalorder %s12, 1
    %p41 = por %p39, %p40
    %p42 = scmp.ne.s32.totalorder %s34, %s37
    %p43 = scmp.eq.s32.totalorder %s12, 0
    %p44 = por %p42, %p43
    %p45 = scmp.ne.s32.totalorder %s34, %s37
    %p46 = scmp.eq.s32.totalorder %s17, 1
    %p47 = por %p45, %p46
    %p48 = scmp.ne.s32.totalorder %s37, %s38
    %p49 = scmp.eq.s32.totalorder %s17, 0
    %p50 = por %p48, %p49
    %p51 = scmp.ne.s32.totalorder %s37, %s38
    %p52 = scmp.eq.s32.totalorder %s18, 1
    %p53 = por %p51, %p52
    %p55 = scmp.ne.s32.totalorder %s38, %s54
    %p56 = scmp.eq.s32.totalorder %s18, 0
    %p57 = por %p55, %p56
    %s58 = ssub.s32 %s20, %s27
    %p59 = scmp.eq.s32.totalorder %s58, 0
    %s61 = sadd.s32 %s60, 1
    %s62 = scalar_select %p59, %s60, %s61
    %p65 = pneg %p59
    %p66 = scmp.eq.s32.totalorder %s12, 1
    %p67 = por %p65, %p66
    %p68 = scmp.ne.s32.totalorder %s60, %s63
    %p69 = scmp.eq.s32.totalorder %s12, 0
    %p70 = por %p68, %p69
    %p71 = scmp.ne.s32.totalorder %s60, %s63
    %p72 = scmp.eq.s32.totalorder %s17, 1
    %p73 = por %p71, %p72
    %p74 = scmp.ne.s32.totalorder %s63, %s64
    %p75 = scmp.eq.s32.totalorder %s17, 0
    %p76 = por %p74, %p75
    %p77 = scmp.ne.s32.totalorder %s63, %s64
    %p78 = scmp.eq.s32.totalorder %s18, 1
    %p79 = por %p77, %p78
    %p81 = scmp.ne.s32.totalorder %s64, %s80
    %p82 = scmp.eq.s32.totalorder %s18, 0
    %p83 = por %p81, %p82
    %s84 = ssub.s32 %s19, %s31
    %p85 = scmp.eq.s32.totalorder %s84, 0
    %s87 = sadd.s32 %s86, 1
    %s88 = scalar_select %p85, %s86, %s87
    %p91 = pneg %p85
    %p92 = scmp.eq.s32.totalorder %s12, 1
    %p93 = por %p91, %p92
    %p94 = scmp.ne.s32.totalorder %s86, %s89
    %p95 = scmp.eq.s32.totalorder %s12, 0
    %p96 = por %p94, %p95
    %p97 = scmp.ne.s32.totalorder %s86, %s89
    %p98 = scmp.eq.s32.totalorder %s17, 1
    %p99 = por %p97, %p98
    %p100 = scmp.ne.s32.totalorder %s89, %s90
    %p101 = scmp.eq.s32.totalorder %s17, 0
    %p102 = por %p100, %p101
    %p103 = scmp.ne.s32.totalorder %s89, %s90
    %p104 = scmp.eq.s32.totalorder %s18, 1
    %p105 = por %p103, %p104
    %p107 = scmp.ne.s32.totalorder %s90, %s106
    %p108 = scmp.eq.s32.totalorder %s18, 0
    %p109 = por %p107, %p108
    %s110 = ssub.s32 %s20, %s27
    %p111 = scmp.eq.s32.totalorder %s110, 0
    %s113 = sadd.s32 %s112, 1
    %s114 = scalar_select %p111, %s112, %s113
    %p117 = pneg %p111
    %p118 = scmp.eq.s32.totalorder %s12, 1
    %p119 = por %p117, %p118
    %p120 = scmp.ne.s32.totalorder %s112, %s115
    %p121 = scmp.eq.s32.totalorder %s12, 0
    %p122 = por %p120, %p121
    %p123 = scmp.ne.s32.totalorder %s112, %s115
    %p124 = scmp.eq.s32.totalorder %s17, 1
    %p125 = por %p123, %p124
    %p126 = scmp.ne.s32.totalorder %s115, %s116
    %p127 = scmp.eq.s32.totalorder %s17, 0
    %p128 = por %p126, %p127
    %p129 = scmp.ne.s32.totalorder %s115, %s116
    %p130 = scmp.eq.s32.totalorder %s18, 1
    %p131 = por %p129, %p130
    %p133 = scmp.ne.s32.totalorder %s116, %s132
    %p134 = scmp.eq.s32.totalorder %s18, 0
    %p135 = por %p133, %p134
    %s136 = ssub.s32 %s19, %s31
    %s137 = ssub.s32 %s20, %s27
    %s138 = sor.u32 %s136, %s137
    %p139 = scmp.eq.s32.totalorder %s138, 0
    %s141 = sadd.s32 %s140, 1
    %s142 = scalar_select %p139, %s140, %s141
    %p145 = pneg %p139
    %p146 = scmp.eq.s32.totalorder %s12, 1
    %p147 = por %p145, %p146
    %p148 = scmp.ne.s32.totalorder %s140, %s143
    %p149 = scmp.eq.s32.totalorder %s12, 0
    %p150 = por %p148, %p149
    %p151 = scmp.ne.s32.totalorder %s140, %s143
    %p152 = scmp.eq.s32.totalorder %s17, 1
    %p153 = por %p151, %p152
    %p154 = scmp.ne.s32.totalorder %s143, %s144
    %p155 = scmp.eq.s32.totalorder %s17, 0
    %p156 = por %p154, %p155
    %p157 = scmp.ne.s32.totalorder %s143, %s144
    %p158 = scmp.eq.s32.totalorder %s18, 1
    %p159 = por %p157, %p158
    %p161 = scmp.ne.s32.totalorder %s144, %s160
    %p162 = scmp.eq.s32.totalorder %s18, 0
    %p163 = por %p161, %p162
    %s165 = sadd.s32 %s164, 1
    %p168 = scmp.eq.s32.totalorder %s12, 1
    %p169 = scmp.ne.s32.totalorder %s164, %s166
    %p170 = scmp.eq.s32.totalorder %s12, 0
    %p171 = por %p169, %p170
    %p172 = scmp.ne.s32.totalorder %s164, %s166
    %p173 = scmp.eq.s32.totalorder %s17, 1
    %p174 = por %p172, %p173
    %p175 = scmp.ne.s32.totalorder %s166, %s167
    %p176 = scmp.eq.s32.totalorder %s17, 0
    %p177 = por %p175, %p176
    %p178 = scmp.ne.s32.totalorder %s166, %s167
    %p179 = scmp.eq.s32.totalorder %s18, 1
    %p180 = por %p178, %p179
    %p182 = scmp.ne.s32.totalorder %s167, %s181
    %p183 = scmp.eq.s32.totalorder %s18, 0
    %p184 = por %p182, %p183
    %s185 = ssub.s32 %s19, %s31
    %p186 = scmp.eq.s32.totalorder %s185, 0
    %s188 = sadd.s32 %s187, 1
    %s189 = scalar_select %p186, %s187, %s188
    %p192 = pneg %p186
    %p193 = scmp.eq.s32.totalorder %s12, 1
    %p194 = por %p192, %p193
    %p195 = scmp.ne.s32.totalorder %s187, %s190
    %p196 = scmp.eq.s32.totalorder %s12, 0
    %p197 = por %p195, %p196
    %p198 = scmp.ne.s32.totalorder %s187, %s190
    %p199 = scmp.eq.s32.totalorder %s17, 1
    %p200 = por %p198, %p199
    %p201 = scmp.ne.s32.totalorder %s190, %s191
    %p202 = scmp.eq.s32.totalorder %s17, 0
    %p203 = por %p201, %p202
    %p204 = scmp.ne.s32.totalorder %s190, %s191
    %p205 = scmp.eq.s32.totalorder %s18, 1
    %p206 = por %p204, %p205
    %p208 = scmp.ne.s32.totalorder %s191, %s207
    %p209 = scmp.eq.s32.totalorder %s18, 0
    %p210 = por %p208, %p209
    %p211 = scmp.le.s32.totalorder 1, %s12
    %p212 = scmp.lt.s32.totalorder %s12, 3
    %p213 = pnand %p211, %p212
    %p214 = pneg %p213
    // Predicated region
    $region9: #{uhg_graphsage_forward.4} parent=5 // pred_check
      _
    $region10: #{uhg_graphsage_forward.4} parent=5 // pred_check_branch
      %216 = sbr.rel (%p213) target = $region12
    $region11: #{uhg_graphsage_forward.4} parent=5 // pred_region
      %s217 = ssub.s32 %s12, 1
      // Predicated region
      $region13: #{uhg_graphsage_forward.4} parent=11 // pred_check
        %p218 = pneg %p76
      $region14: #{uhg_graphsage_forward.4} parent=11 // pred_check_branch
        %220 = sbr.rel (%p218) target = $region16
      $region15: #{uhg_graphsage_forward.4} parent=11 // pred_region
        %s221 = smul.u32 2, %s22
        %p222 = scmp.lt.s32.totalorder %s221, 1
        %s223 = scalar_select %p222, %s221, 1
        %s224 = smul.addr %s223, 8
        %s225 = scalar_lea.vmem %s1, %s224
        %s226 = smul.u32 2, %s22
      $region16: #{uhg_graphsage_forward.4} parent=11 // pred_fallthru
        _
      // Predicated region
      $region17: #{uhg_graphsage_forward.4} parent=11 // pred_check
        %p227 = pneg %p128
      $region18: #{uhg_graphsage_forward.4} parent=11 // pred_check_branch
        %229 = sbr.rel (%p227) target = $region20
      $region19: #{uhg_graphsage_forward.4} parent=11 // pred_region
        %p230 = scmp.lt.s32.totalorder %s22, 0
        %s231 = scalar_select %p230, %s22, 0
        %s232 = scalar_lea.vmem %s3, %s231
      $region20: #{uhg_graphsage_forward.4} parent=11 // pred_fallthru
        _
      // Predicated region
      $region21: #{uhg_graphsage_forward.4} parent=11 // pred_check
        %p233 = pneg %p177
      $region22: #{uhg_graphsage_forward.4} parent=11 // pred_check_branch
        %235 = sbr.rel (%p233) target = $region24
      $region23: #{uhg_graphsage_forward.4} parent=11 // pred_region
        _
      $region24: #{uhg_graphsage_forward.4} parent=11 // pred_fallthru
        _
    $region12: #{uhg_graphsage_forward.4} parent=5 // pred_fallthru
      _
    %p236 = scmp.lt.s32.totalorder %s12, 2
    // Predicated region
    $region25: #{uhg_graphsage_forward.4} parent=5 // pred_check
      %p237 = pneg %p236
    $region26: #{uhg_graphsage_forward.4} parent=5 // pred_check_branch
      %239 = sbr.rel (%p237) target = $region28
    $region27: #{uhg_graphsage_forward.4} parent=5 // pred_region
      // Predicated region
      $region29: #{uhg_graphsage_forward.4} parent=27 // pred_check
        %p240 = pneg %p44
      $region30: #{uhg_graphsage_forward.4} parent=27 // pred_check_branch
        %242 = sbr.rel (%p240) target = $region32
      $region31: #{uhg_graphsage_forward.4} parent=27 // pred_region
        %p243 = scmp.lt.s32.totalorder %s19, 1
        %s244 = scalar_select %p243, %s19, 1
        %s245 = smul.addr %s244, 8
        %s246 = scalar_lea.vmem %s0, %s245
      $region32: #{uhg_graphsage_forward.4} parent=27 // pred_fallthru
        _
      // Predicated region
      $region33: #{uhg_graphsage_forward.4} parent=27 // pred_check
        %p247 = pneg %p96
      $region34: #{uhg_graphsage_forward.4} parent=27 // pred_check_branch
        %249 = sbr.rel (%p247) target = $region36
      $region35: #{uhg_graphsage_forward.4} parent=27 // pred_region
        %p250 = scmp.lt.s32.totalorder %s19, 1
        %s251 = scalar_select %p250, %s19, 1
        %s252 = smul.addr %s251, 8
        %s253 = scalar_lea.vmem %s2, %s252
      $region36: #{uhg_graphsage_forward.4} parent=27 // pred_fallthru
        _
      // Predicated region
      $region37: #{uhg_graphsage_forward.4} parent=27 // pred_check
        %p254 = pneg %p150
      $region38: #{uhg_graphsage_forward.4} parent=27 // pred_check_branch
        %256 = sbr.rel (%p254) target = $region40
      $region39: #{uhg_graphsage_forward.4} parent=27 // pred_region
        %p257 = scmp.lt.s32.totalorder %s19, 1
        %s258 = scalar_select %p257, %s19, 1
        %p259 = scmp.lt.s32.totalorder %s20, 0
        %s260 = scalar_select %p259, %s20, 0
        %s261 = sadd.s32 %s260, %s258
        %s262 = smul.addr %s261, 4
        %s263 = scalar_lea.vmem %s4, %s262
      $region40: #{uhg_graphsage_forward.4} parent=27 // pred_fallthru
        _
    $region28: #{uhg_graphsage_forward.4} parent=5 // pred_fallthru
      _
    %p264 = scmp.le.s32.totalorder 1, %s12
    %p265 = scmp.lt.s32.totalorder %s12, 3
    %p266 = pnand %p264, %p265
    %p267 = pneg %p266
    // Predicated region
    $region41: #{uhg_graphsage_forward.4} parent=5 // pred_check
      _
    $region42: #{uhg_graphsage_forward.4} parent=5 // pred_check_branch
      %269 = sbr.rel (%p266) target = $region44
    $region43: #{uhg_graphsage_forward.4} parent=5 // pred_region
      %s270 = ssub.s32 %s12, 1
      %p271 = scmp.lt.s32.totalorder %s21, 1
      %s272 = scalar_select %p271, %s21, 1
      %s273 = smul.addr %s272, 8
      %s274 = scalar_lea.vmem %s0, %s273
      %p275 = pneg %p50
      %p276 = pneg %p47
      %s277 = smul.u32 2, %s22
      %p278 = scmp.lt.s32.totalorder %s277, 1
      %s279 = scalar_select %p278, %s277, 1
      %s280 = smul.addr %s279, 8
      %s281 = scalar_lea.vmem %s1, %s280
      %p282 = pneg %p76
      %p283 = pneg %p73
      %p284 = scmp.lt.s32.totalorder %s21, 1
      %s285 = scalar_select %p284, %s21, 1
      %s286 = smul.addr %s285, 8
      %s287 = scalar_lea.vmem %s2, %s286
      %p288 = pneg %p102
      %p289 = pneg %p99
      %p290 = scmp.lt.s32.totalorder %s22, 0
      %s291 = scalar_select %p290, %s22, 0
      %s292 = scalar_lea.vmem %s3, %s291
      %p293 = pneg %p128
      %p294 = pneg %p125
      %p295 = scmp.lt.s32.totalorder %s21, 1
      %s296 = scalar_select %p295, %s21, 1
      %p297 = scmp.lt.s32.totalorder %s22, 0
      %s298 = scalar_select %p297, %s22, 0
      %s299 = sadd.s32 %s298, %s296
      %s300 = smul.addr %s299, 4
      %s301 = scalar_lea.vmem %s4, %s300
      %p302 = pneg %p156
      %p303 = pneg %p153
      %p304 = pneg %p177
      %p305 = pneg %p174
      %p306 = pneg %p203
      %p307 = pneg %p200
      %p308 = scmp.lt.s32.totalorder %s21, 1
      %s309 = scalar_select %p308, %s21, 1
      %s310 = smul.addr %s309, 8
      %s311 = scalar_lea.vmem %s6, %s310
      %p312 = scmp.lt.s32.totalorder %s21, 1
      %s313 = scalar_select %p312, %s21, 1
      %s314 = smul.addr %s313, 8
      %s315 = scalar_lea.vmem %s0, %s314
      %s316 = smul.u32 2, %s22
      %p317 = scmp.lt.s32.totalorder %s316, 1
      %s318 = scalar_select %p317, %s316, 1
      %s319 = smul.addr %s318, 8
      %s320 = scalar_lea.vmem %s1, %s319
      %s321 = smul.u32 2, %s22
      %p322 = scmp.lt.s32.totalorder %s21, 1
      %s323 = scalar_select %p322, %s21, 1
      %s324 = smul.addr %s323, 8
      %s325 = scalar_lea.vmem %s2, %s324
      %p326 = scmp.lt.s32.totalorder %s22, 0
      %s327 = scalar_select %p326, %s22, 0
      %s328 = scalar_lea.vmem %s3, %s327
      %p329 = scmp.lt.s32.totalorder %s21, 1
      %s330 = scalar_select %p329, %s21, 1
      %p331 = scmp.lt.s32.totalorder %s22, 0
      %s332 = scalar_select %p331, %s22, 0
      %s333 = sadd.s32 %s332, %s330
      %s334 = smul.addr %s333, 4
      %s335 = scalar_lea.vmem %s4, %s334
      %p336 = scmp.lt.s32.totalorder %s21, 1
      %s337 = scalar_select %p336, %s21, 1
      %s338 = smul.addr %s337, 8
      %s339 = scalar_lea.vmem %s6, %s338
      %p341 = scmp.eq.s32.totalorder %s22, 0
      // Predicated region
      $region45: #{uhg_graphsage_forward.4} parent=43 // pred_check
        %p342 = pneg %p341
      $region46: #{uhg_graphsage_forward.4} parent=43 // pred_check_branch
        %344 = sbr.rel (%p342) target = $region48
      $region47: #{uhg_graphsage_forward.4} parent=43 // pred_region
        %vm345 = vcmask 269312
        %346 = vst.msk [vmem:[#allocation2] sm:$0xff] %vm345, 0.0
      $region48: #{uhg_graphsage_forward.4} parent=43 // pred_fallthru
        _
      %v347 = vld [vmem:[%s315] sm:$0xff]
      %v348 = vld [vmem:[%s320] sm:$0xff]
      %v349 = vld [vmem:[%s320 + $0x8] sm:$0xff]
      %v350 = vpack.c.bf16 %v347, %v347
      %v351 = vpack.c.bf16 %v349, %v348
      %vm352 = vcmask 269312
      %v354 = vsel %vm352, %v350, 0
      %v357 = vsel %vm352, %v351, 0
      %359 = vmatprep.subr.bf16.mxu0 0
      %360 = vmatpush1.bf16.xpose.msra.mxu0 %v357
      %361 = vmatprep.subr.bf16.mxu0 0
      %362 = vmatpush1.bf16.xpose.msra.mxu0 0
      %363 = vmatprep.subr.bf16.mxu0 0
      %364 = vmatpush1.bf16.xpose.msra.mxu0 0
      %365 = vmatprep.subr.bf16.mxu0 0
      %366 = vmatpush1.bf16.xpose.msra.mxu0 0
      %367 = vmatprep.subr.bf16.mxu0 0
      %368 = vmatpush1.bf16.xpose.msra.mxu0 0
      %369 = vmatprep.subr.bf16.mxu0 0
      %370 = vmatpush1.bf16.xpose.msra.mxu0 0
      %371 = vmatprep.subr.bf16.mxu0 0
      %372 = vmatpush1.bf16.xpose.msra.mxu0 0
      %373 = vmatprep.subr.bf16.mxu0 0
      %374 = vmatpush1.bf16.xpose.msra.mxu0 0
      %375 = vmatprep.subr.bf16.mxu0 0
      %376 = vmatpush1.bf16.xpose.msra.mxu0 0
      %377 = vmatprep.subr.bf16.mxu0 0
      %378 = vmatpush1.bf16.xpose.msra.mxu0 0
      %379 = vmatprep.subr.bf16.mxu0 0
      %380 = vmatpush1.bf16.xpose.msra.mxu0 0
      %381 = vmatprep.subr.bf16.mxu0 0
      %382 = vmatpush1.bf16.xpose.msra.mxu0 0
      %383 = vmatprep.subr.bf16.mxu0 0
      %384 = vmatpush1.bf16.xpose.msra.mxu0 0
      %385 = vmatprep.subr.bf16.mxu0 0
      %386 = vmatpush1.bf16.xpose.msra.mxu0 0
      %387 = vmatprep.subr.bf16.mxu0 0
      %388 = vmatpush1.bf16.xpose.msra.mxu0 0
      %389 = vmatprep.subr.bf16.mxu0 0
      %390 = vmatpush1.bf16.xpose.msra.mxu0 0
      %391 = vmatprep.mubr.bf16.mxu0 0
      %392 = vmatmul.mubr.bf16.gmra.mrb[0].mxu0 %v354
      %v393 = vpop.f32.mrb[0].mxu0
      %v394 = vadd.f32 0.0, %v393
      %v395 = vpop.f32.mrb[0].mxu0
      %v396 = vpop.f32.mrb[0].mxu0
      %v397 = vpop.f32.mrb[0].mxu0
      %398 = vdwg.mxu0
      %v399 = vmul.f32 %v394, %v394
      %v400 = vld [vmem:[%s325] sm:$0xff]
      %402 = vset.pattern.permute.xlu0 0
      %403 = vperm.xlu0 %402, %v400
      %v404 = vpop.permute.xlu0 %403
      %v406 = vmul.f32 %v399, %v404
      %v407 = vld [vmem:[%s328] sm:$0x1]
      %v409 = vlaneseq
      %v410 = vshrl.u32 %v409, 7
      %v411 = vsub.s32 0, %v410
      %v412 = vrot.slane %v407, %v411
      %v414 = vmul.f32 %v406, %v412
      %v415 = vsub.f32 1.0, %v414
      %v416 = vmin.f32 %v415, 80.0
      %v417 = vmul.f32 %v416, 1.442695
      %v418 = vpow.pop %v417
      %v419 = vld [vmem:[%s335] sm:$0xf]
      %v420 = vpack.c.bf16 %v418, %v418
      %v421 = vmul.bf16 %v419, %v420
      %v422 = vlaneseq
      %v423 = vand.u32 %v422, 127
      %vm424 = vcmp.eq.s32.totalorder %v423, 32
      %v425 = vsel %vm424, 1, 0
      %vm426 = vcmp.eq.s32.totalorder %v425, 1
      %v427 = vsel %vm426, 1.0, %v348
      %v428 = vsel %vm426, 1.0, %v349
      %v429 = vpack.c.bf16 %v428, %v427
      %v430 = vld [vmem:[#allocation2] sm:$0xff]
      %vm431 = vcmask 130048
      %v433 = vsel %vm431, %v421, 0
      %435 = vmatprep.subr.bf16.mxu0 0
      %436 = vmatpush1.bf16.msra.mxu0 %v429
      %437 = vmatprep.subr.bf16.mxu0 0
      %438 = vmatpush1.bf16.msra.mxu0 0
      %439 = vmatprep.subr.bf16.mxu0 0
      %440 = vmatpush1.bf16.msra.mxu0 0
      %441 = vmatprep.subr.bf16.mxu0 0
      %442 = vmatpush1.bf16.msra.mxu0 0
      %443 = vmatprep.subr.bf16.mxu0 0
      %444 = vmatpush1.bf16.msra.mxu0 0
      %445 = vmatprep.subr.bf16.mxu0 0
      %446 = vmatpush1.bf16.msra.mxu0 0
      %447 = vmatprep.subr.bf16.mxu0 0
      %448 = vmatpush1.bf16.msra.mxu0 0
      %449 = vmatprep.subr.bf16.mxu0 0
      %450 = vmatpush1.bf16.msra.mxu0 0
      %451 = vmatprep.subr.bf16.mxu0 0
      %452 = vmatpush1.bf16.msra.mxu0 0
      %453 = vmatprep.subr.bf16.mxu0 0
      %454 = vmatpush1.bf16.msra.mxu0 0
      %455 = vmatprep.subr.bf16.mxu0 0
      %456 = vmatpush1.bf16.msra.mxu0 0
      %457 = vmatprep.subr.bf16.mxu0 0
      %458 = vmatpush1.bf16.msra.mxu0 0
      %459 = vmatprep.subr.bf16.mxu0 0
      %460 = vmatpush1.bf16.msra.mxu0 0
      %461 = vmatprep.subr.bf16.mxu0 0
      %462 = vmatpush1.bf16.msra.mxu0 0
      %463 = vmatprep.subr.bf16.mxu0 0
      %464 = vmatpush1.bf16.msra.mxu0 0
      %465 = vmatprep.subr.bf16.mxu0 0
      %466 = vmatpush1.bf16.msra.mxu0 0
      %467 = vmatprep.mubr.bf16.mxu0 0
      %468 = vmatmul.mubr.bf16.gmra.mrb[0].mxu0 %v433
      %v469 = vpop.f32.mrb[0].mxu0
      %v470 = vadd.f32 0.0, %v469
      %v471 = vpop.f32.mrb[0].mxu0
      %v472 = vpop.f32.mrb[0].mxu0
      %v473 = vpop.f32.mrb[0].mxu0
      %474 = vdwg.mxu0
      %v475 = vadd.f32 %v430, %v470
      %476 = vst.msk [vmem:[#allocation2] sm:$0xff] %vm352, %v475
      // Predicated region
      $region49: #{uhg_graphsage_forward.4} parent=43 // pred_check
        %p477 = pneg %p341
      $region50: #{uhg_graphsage_forward.4} parent=43 // pred_check_branch
        %479 = sbr.rel (%p477) target = $region52
      $region51: #{uhg_graphsage_forward.4} parent=43 // pred_region
        %v480 = vld [vmem:[#allocation2] sm:$0xff]
        %v481 = vmax.f32 %v480, 1e-06
        %483 = vset.pattern.permute.xlu0 32
        %484 = vperm.xlu0 %483, %v481
        %v485 = vpop.permute.xlu0 %484
        %v487 = vrcp.pop %v485
        %v488 = vmul.f32 %v480, %v487
        %490 = vrot.lane.b32.xlu0 %v347, 32
        %v491 = vpop.permute.xlu0 %490
        %vm493 = vcmask 261120
        %v494 = vsel %vm493, %v488, %v491
        %v495 = vld [vmem:[%s5] sm:$0xff]
        %v496 = vld [vmem:[%s5 + $0x8] sm:$0xff]
        %v497 = vld [vmem:[%s5 + $0x10] sm:$0xff]
        %v498 = vld [vmem:[%s5 + $0x18] sm:$0xff]
        %v499 = vld [vmem:[%s5 + $0x20] sm:$0xff]
        %v500 = vld [vmem:[%s5 + $0x28] sm:$0xff]
        %v501 = vld [vmem:[%s5 + $0x30] sm:$0xff]
        %v502 = vld [vmem:[%s5 + $0x38] sm:$0xff]
        %vm503 = vcmask 523264
        %v505 = vsel %vm503, %v494, 0
        %507 = vmatprep.subr.mxu0 0.0
        %508 = vmatpush1.msra.mxu0 %v495
        %509 = vmatprep.subr.mxu0 0.0
        %510 = vmatpush1.msra.mxu0 %v496
        %511 = vmatprep.subr.mxu0 0.0
        %512 = vmatpush1.msra.mxu0 %v497
        %513 = vmatprep.subr.mxu0 0.0
        %514 = vmatpush1.msra.mxu0 %v498
        %515 = vmatprep.subr.mxu0 0.0
        %516 = vmatpush1.msra.mxu0 %v499
        %517 = vmatprep.subr.mxu0 0.0
        %518 = vmatpush1.msra.mxu0 %v500
        %519 = vmatprep.subr.mxu0 0.0
        %520 = vmatpush1.msra.mxu0 %v501
        %521 = vmatprep.subr.mxu0 0.0
        %522 = vmatpush1.msra.mxu0 %v502
        %523 = vmatprep.subr.mxu0 0.0
        %524 = vmatpush1.msra.mxu0 0.0
        %525 = vmatprep.subr.mxu0 0.0
        %526 = vmatpush1.msra.mxu0 0.0
        %527 = vmatprep.subr.mxu0 0.0
        %528 = vmatpush1.msra.mxu0 0.0
        %529 = vmatprep.subr.mxu0 0.0
        %530 = vmatpush1.msra.mxu0 0.0
        %531 = vmatprep.subr.mxu0 0.0
        %532 = vmatpush1.msra.mxu0 0.0
        %533 = vmatprep.subr.mxu0 0.0
        %534 = vmatpush1.msra.mxu0 0.0
        %535 = vmatprep.subr.mxu0 0.0
        %536 = vmatpush1.msra.mxu0 0.0
        %537 = vmatprep.subr.mxu0 0.0
        %538 = vmatpush1.msra.mxu0 0.0
        %539 = vmatprep.subr.mxu0 0.0
        %540 = vmatpush1.msra.mxu0 0.0
        %541 = vmatprep.subr.mxu0 0.0
        %542 = vmatpush1.msra.mxu0 0.0
        %543 = vmatprep.subr.mxu0 0.0
        %544 = vmatpush1.msra.mxu0 0.0
        %545 = vmatprep.subr.mxu0 0.0
        %546 = vmatpush1.msra.mxu0 0.0
        %547 = vmatprep.subr.mxu0 0.0
        %548 = vmatpush1.msra.mxu0 0.0
        %549 = vmatprep.subr.mxu0 0.0
        %550 = vmatpush1.msra.mxu0 0.0
        %551 = vmatprep.subr.mxu0 0.0
        %552 = vmatpush1.msra.mxu0 0.0
        %553 = vmatprep.subr.mxu0 0.0
        %554 = vmatpush1.msra.mxu0 0.0
        %555 = vmatprep.subr.mxu0 0.0
        %556 = vmatpush1.msra.mxu0 0.0
        %557 = vmatprep.subr.mxu0 0.0
        %558 = vmatpush1.msra.mxu0 0.0
        %559 = vmatprep.subr.mxu0 0.0
        %560 = vmatpush1.msra.mxu0 0.0
        %561 = vmatprep.subr.mxu0 0.0
        %562 = vmatpush1.msra.mxu0 0.0
        %563 = vmatprep.subr.mxu0 0.0
        %564 = vmatpush1.msra.mxu0 0.0
        %565 = vmatprep.subr.mxu0 0.0
        %566 = vmatpush1.msra.mxu0 0.0
        %567 = vmatprep.subr.mxu0 0.0
        %568 = vmatpush1.msra.mxu0 0.0
        %569 = vmatprep.subr.mxu0 0.0
        %570 = vmatpush1.msra.mxu0 0.0
        %571 = vmatprep.mubr.f32.mxu0 0.0
        %572 = vmatmul.mubr.f32.gmra.mrb[0].mxu0 %v505
        %v573 = vpop.f32.mrb[0].mxu0
        %v574 = vadd.f32 0.0, %v573
        %v575 = vpop.f32.mrb[0].mxu0
        %576 = vdwg.mxu0
        %v577 = vmax.f32 %v574, 0.0
        %578 = vst.msk [vmem:[%s339] sm:$0xff] %vm493, %v577
      $region52: #{uhg_graphsage_forward.4} parent=43 // pred_fallthru
        _
      %p579 = scmp.lt.s32.totalorder %s21, 1
      %s580 = scalar_select %p579, %s21, 1
      %s581 = smul.addr %s580, 8
      %s582 = scalar_lea.vmem %s6, %s581
      // Predicated region
      $region53: #{uhg_graphsage_forward.4} parent=43 // pred_check
        %p583 = pneg %p200
      $region54: #{uhg_graphsage_forward.4} parent=43 // pred_check_branch
        %585 = sbr.rel (%p583) target = $region56
      $region55: #{uhg_graphsage_forward.4} parent=43 // pred_region
        _
      $region56: #{uhg_graphsage_forward.4} parent=43 // pred_fallthru
        _
    $region44: #{uhg_graphsage_forward.4} parent=5 // pred_fallthru
      _
    %p586 = scmp.le.s32.totalorder 2, %s12
    // Predicated region
    $region57: #{uhg_graphsage_forward.4} parent=5 // pred_check
      %p587 = pneg %p586
    $region58: #{uhg_graphsage_forward.4} parent=5 // pred_check_branch
      %589 = sbr.rel (%p587) target = $region60
    $region59: #{uhg_graphsage_forward.4} parent=5 // pred_region
      %s590 = ssub.s32 %s12, 2
      // Predicated region
      $region61: #{uhg_graphsage_forward.4} parent=59 // pred_check
        %p591 = pneg %p206
      $region62: #{uhg_graphsage_forward.4} parent=59 // pred_check_branch
        %593 = sbr.rel (%p591) target = $region64
      $region63: #{uhg_graphsage_forward.4} parent=59 // pred_region
        %p594 = scmp.lt.s32.totalorder %s23, 1
        %s595 = scalar_select %p594, %s23, 1
        %s596 = smul.addr %s595, 8
        %s597 = scalar_lea.vmem %s6, %s596
      $region64: #{uhg_graphsage_forward.4} parent=59 // pred_fallthru
        _
    $region60: #{uhg_graphsage_forward.4} parent=5 // pred_fallthru
      _
  $region6: #{uhg_graphsage_forward.4} parent=0 // loop_footer
    %s16 = sadd.s32 1, %s12
  $region7: #{uhg_graphsage_forward.4} parent=0 // loop_footer_branch
    %11 = sbr.rel target = $region3
  $region8: #{uhg_graphsage_forward.4} parent=0 // loop_exit
    _

// kernel: uhg_graphsage_forward.3
$region0: #{uhg_graphsage_forward.3}
  #allocation0 [shape = 'u32[]', space=smem, size = 0x4, offset = 0x4, fixed_abs, tag = 'smem constant byte address 0x4 - core index']
  #allocation1 [shape = 'u32[144,128]{1,0:T(1,128)}', space=vmem, size = 0x12000, scoped, tag = 'internal scratch']
  #allocation2 [shape = 'f32[8,9]{1,0:T(8,128)}', space=vmem, size = 0x1000, scoped, tag = 'scratch operand']
  %s0 = inlined_call_operand.vmem [shape: f32[16,9], index: 0, kind: input, shape index: {}]
  %s1 = inlined_call_operand.vmem [shape: f32[16,9], index: 1, kind: input, shape index: {}]
  %s2 = inlined_call_operand.vmem [shape: f32[16,1], index: 2, kind: input, shape index: {}]
  %s3 = inlined_call_operand.vmem [shape: f32[1,16], index: 3, kind: input, shape index: {}]
  %s4 = inlined_call_operand.vmem [shape: bf16[16,16], index: 4, kind: input, shape index: {}]
  %s5 = inlined_call_operand.vmem [shape: f32[16,32], index: 5, kind: input, shape index: {}]
  %s6 = inlined_call_operand.vmem [shape: f32[16,32], index: 6, kind: output, shape index: {}]
  %s7 = sld [smem:[#allocation0]]
  $region65: #{uhg_graphsage_forward.3} parent=0
    _
  %s9 = ssub.s32 1, %s7
  %s10 = scalar_select 0, %s9, %s7
  loop: start=0, step=1, limit=4
  $region2: #{uhg_graphsage_forward.3} parent=0 // loop_pre_header
    _
  $region3: #{uhg_graphsage_forward.3} parent=0 // loop_header
    %s12 = sphi 0, %s16
    %p13 = scmp.ge.s32.totalorder %s12, 4
    %s19 = sphi 0, %s31
    %s20 = sphi 0, %s27
    %s21 = sphi 0, %s19
    %s22 = sphi 0, %s20
    %s23 = sphi 0, %s21
    %s24 = sphi 0, %s22
    %s34 = sphi 0, %s36
    %s37 = sphi 0, %s34
    %s38 = sphi 0, %s37
    %s54 = sphi 0, %s38
    %s60 = sphi 0, %s62
    %s63 = sphi 0, %s60
    %s64 = sphi 0, %s63
    %s80 = sphi 0, %s64
    %s86 = sphi 0, %s88
    %s89 = sphi 0, %s86
    %s90 = sphi 0, %s89
    %s106 = sphi 0, %s90
    %s112 = sphi 0, %s114
    %s115 = sphi 0, %s112
    %s116 = sphi 0, %s115
    %s132 = sphi 0, %s116
    %s140 = sphi 0, %s142
    %s143 = sphi 0, %s140
    %s144 = sphi 0, %s143
    %s160 = sphi 0, %s144
    %s164 = sphi 0, %s164
    %s166 = sphi 0, %s164
    %s167 = sphi 0, %s166
    %s181 = sphi 0, %s167
    %s187 = sphi 0, %s189
    %s190 = sphi 0, %s187
    %s191 = sphi 0, %s190
    %s207 = sphi 0, %s191
  $region4: #{uhg_graphsage_forward.3} parent=0 // loop_header_branch
    %15 = sbr.rel (%p13) target = $region8
  $region5: #{uhg_graphsage_forward.3} parent=0 // loop_body
    %s17 = ssub.s32 %s12, 1
    %s18 = ssub.s32 %s12, 2
    %s25 = sadd.s32 1, %s20
    %p26 = scmp.ge.s32.totalorder %s25, 1
    %s27 = scalar_select %p26, 0, %s25
    %s28 = sadd.s32 1, %s19
    %s29 = scalar_select %p26, %s28, %s19
    %p30 = scmp.ge.s32.totalorder %s29, 2
    %s31 = scalar_select %p30, 0, %s29
    %s32 = ssub.s32 %s19, %s31
    %p33 = scmp.eq.s32.totalorder %s32, 0
    %s35 = sadd.s32 %s34, 1
    %s36 = scalar_select %p33, %s34, %s35
    %p39 = pneg %p33
    %p40 = scmp.eq.s32.totalorder %s12, 1
    %p41 = por %p39, %p40
    %p42 = scmp.ne.s32.totalorder %s34, %s37
    %p43 = scmp.eq.s32.totalorder %s12, 0
    %p44 = por %p42, %p43
    %p45 = scmp.ne.s32.totalorder %s34, %s37
    %p46 = scmp.eq.s32.totalorder %s17, 1
    %p47 = por %p45, %p46
    %p48 = scmp.ne.s32.totalorder %s37, %s38
    %p49 = scmp.eq.s32.totalorder %s17, 0
    %p50 = por %p48, %p49
    %p51 = scmp.ne.s32.totalorder %s37, %s38
    %p52 = scmp.eq.s32.totalorder %s18, 1
    %p53 = por %p51, %p52
    %p55 = scmp.ne.s32.totalorder %s38, %s54
    %p56 = scmp.eq.s32.totalorder %s18, 0
    %p57 = por %p55, %p56
    %s58 = ssub.s32 %s20, %s27
    %p59 = scmp.eq.s32.totalorder %s58, 0
    %s61 = sadd.s32 %s60, 1
    %s62 = scalar_select %p59, %s60, %s61
    %p65 = pneg %p59
    %p66 = scmp.eq.s32.totalorder %s12, 1
    %p67 = por %p65, %p66
    %p68 = scmp.ne.s32.totalorder %s60, %s63
    %p69 = scmp.eq.s32.totalorder %s12, 0
    %p70 = por %p68, %p69
    %p71 = scmp.ne.s32.totalorder %s60, %s63
    %p72 = scmp.eq.s32.totalorder %s17, 1
    %p73 = por %p71, %p72
    %p74 = scmp.ne.s32.totalorder %s63, %s64
    %p75 = scmp.eq.s32.totalorder %s17, 0
    %p76 = por %p74, %p75
    %p77 = scmp.ne.s32.totalorder %s63, %s64
    %p78 = scmp.eq.s32.totalorder %s18, 1
    %p79 = por %p77, %p78
    %p81 = scmp.ne.s32.totalorder %s64, %s80
    %p82 = scmp.eq.s32.totalorder %s18, 0
    %p83 = por %p81, %p82
    %s84 = ssub.s32 %s19, %s31
    %p85 = scmp.eq.s32.totalorder %s84, 0
    %s87 = sadd.s32 %s86, 1
    %s88 = scalar_select %p85, %s86, %s87
    %p91 = pneg %p85
    %p92 = scmp.eq.s32.totalorder %s12, 1
    %p93 = por %p91, %p92
    %p94 = scmp.ne.s32.totalorder %s86, %s89
    %p95 = scmp.eq.s32.totalorder %s12, 0
    %p96 = por %p94, %p95
    %p97 = scmp.ne.s32.totalorder %s86, %s89
    %p98 = scmp.eq.s32.totalorder %s17, 1
    %p99 = por %p97, %p98
    %p100 = scmp.ne.s32.totalorder %s89, %s90
    %p101 = scmp.eq.s32.totalorder %s17, 0
    %p102 = por %p100, %p101
    %p103 = scmp.ne.s32.totalorder %s89, %s90
    %p104 = scmp.eq.s32.totalorder %s18, 1
    %p105 = por %p103, %p104
    %p107 = scmp.ne.s32.totalorder %s90, %s106
    %p108 = scmp.eq.s32.totalorder %s18, 0
    %p109 = por %p107, %p108
    %s110 = ssub.s32 %s20, %s27
    %p111 = scmp.eq.s32.totalorder %s110, 0
    %s113 = sadd.s32 %s112, 1
    %s114 = scalar_select %p111, %s112, %s113
    %p117 = pneg %p111
    %p118 = scmp.eq.s32.totalorder %s12, 1
    %p119 = por %p117, %p118
    %p120 = scmp.ne.s32.totalorder %s112, %s115
    %p121 = scmp.eq.s32.totalorder %s12, 0
    %p122 = por %p120, %p121
    %p123 = scmp.ne.s32.totalorder %s112, %s115
    %p124 = scmp.eq.s32.totalorder %s17, 1
    %p125 = por %p123, %p124
    %p126 = scmp.ne.s32.totalorder %s115, %s116
    %p127 = scmp.eq.s32.totalorder %s17, 0
    %p128 = por %p126, %p127
    %p129 = scmp.ne.s32.totalorder %s115, %s116
    %p130 = scmp.eq.s32.totalorder %s18, 1
    %p131 = por %p129, %p130
    %p133 = scmp.ne.s32.totalorder %s116, %s132
    %p134 = scmp.eq.s32.totalorder %s18, 0
    %p135 = por %p133, %p134
    %s136 = ssub.s32 %s19, %s31
    %s137 = ssub.s32 %s20, %s27
    %s138 = sor.u32 %s136, %s137
    %p139 = scmp.eq.s32.totalorder %s138, 0
    %s141 = sadd.s32 %s140, 1
    %s142 = scalar_select %p139, %s140, %s141
    %p145 = pneg %p139
    %p146 = scmp.eq.s32.totalorder %s12, 1
    %p147 = por %p145, %p146
    %p148 = scmp.ne.s32.totalorder %s140, %s143
    %p149 = scmp.eq.s32.totalorder %s12, 0
    %p150 = por %p148, %p149
    %p151 = scmp.ne.s32.totalorder %s140, %s143
    %p152 = scmp.eq.s32.totalorder %s17, 1
    %p153 = por %p151, %p152
    %p154 = scmp.ne.s32.totalorder %s143, %s144
    %p155 = scmp.eq.s32.totalorder %s17, 0
    %p156 = por %p154, %p155
    %p157 = scmp.ne.s32.totalorder %s143, %s144
    %p158 = scmp.eq.s32.totalorder %s18, 1
    %p159 = por %p157, %p158
    %p161 = scmp.ne.s32.totalorder %s144, %s160
    %p162 = scmp.eq.s32.totalorder %s18, 0
    %p163 = por %p161, %p162
    %s165 = sadd.s32 %s164, 1
    %p168 = scmp.eq.s32.totalorder %s12, 1
    %p169 = scmp.ne.s32.totalorder %s164, %s166
    %p170 = scmp.eq.s32.totalorder %s12, 0
    %p171 = por %p169, %p170
    %p172 = scmp.ne.s32.totalorder %s164, %s166
    %p173 = scmp.eq.s32.totalorder %s17, 1
    %p174 = por %p172, %p173
    %p175 = scmp.ne.s32.totalorder %s166, %s167
    %p176 = scmp.eq.s32.totalorder %s17, 0
    %p177 = por %p175, %p176
    %p178 = scmp.ne.s32.totalorder %s166, %s167
    %p179 = scmp.eq.s32.totalorder %s18, 1
    %p180 = por %p178, %p179
    %p182 = scmp.ne.s32.totalorder %s167, %s181
    %p183 = scmp.eq.s32.totalorder %s18, 0
    %p184 = por %p182, %p183
    %s185 = ssub.s32 %s19, %s31
    %p186 = scmp.eq.s32.totalorder %s185, 0
    %s188 = sadd.s32 %s187, 1
    %s189 = scalar_select %p186, %s187, %s188
    %p192 = pneg %p186
    %p193 = scmp.eq.s32.totalorder %s12, 1
    %p194 = por %p192, %p193
    %p195 = scmp.ne.s32.totalorder %s187, %s190
    %p196 = scmp.eq.s32.totalorder %s12, 0
    %p197 = por %p195, %p196
    %p198 = scmp.ne.s32.totalorder %s187, %s190
    %p199 = scmp.eq.s32.totalorder %s17, 1
    %p200 = por %p198, %p199
    %p201 = scmp.ne.s32.totalorder %s190, %s191
    %p202 = scmp.eq.s32.totalorder %s17, 0
    %p203 = por %p201, %p202
    %p204 = scmp.ne.s32.totalorder %s190, %s191
    %p205 = scmp.eq.s32.totalorder %s18, 1
    %p206 = por %p204, %p205
    %p208 = scmp.ne.s32.totalorder %s191, %s207
    %p209 = scmp.eq.s32.totalorder %s18, 0
    %p210 = por %p208, %p209
    %p211 = scmp.le.s32.totalorder 1, %s12
    %p212 = scmp.lt.s32.totalorder %s12, 3
    %p213 = pnand %p211, %p212
    %p214 = pneg %p213
    // Predicated region
    $region9: #{uhg_graphsage_forward.3} parent=5 // pred_check
      _
    $region10: #{uhg_graphsage_forward.3} parent=5 // pred_check_branch
      %216 = sbr.rel (%p213) target = $region12
    $region11: #{uhg_graphsage_forward.3} parent=5 // pred_region
      %s217 = ssub.s32 %s12, 1
      // Predicated region
      $region13: #{uhg_graphsage_forward.3} parent=11 // pred_check
        %p218 = pneg %p76
      $region14: #{uhg_graphsage_forward.3} parent=11 // pred_check_branch
        %220 = sbr.rel (%p218) target = $region16
      $region15: #{uhg_graphsage_forward.3} parent=11 // pred_region
        %s221 = smul.u32 2, %s22
        %p222 = scmp.lt.s32.totalorder %s221, 1
        %s223 = scalar_select %p222, %s221, 1
        %s224 = smul.addr %s223, 8
        %s225 = scalar_lea.vmem %s1, %s224
        %s226 = smul.u32 2, %s22
      $region16: #{uhg_graphsage_forward.3} parent=11 // pred_fallthru
        _
      // Predicated region
      $region17: #{uhg_graphsage_forward.3} parent=11 // pred_check
        %p227 = pneg %p128
      $region18: #{uhg_graphsage_forward.3} parent=11 // pred_check_branch
        %229 = sbr.rel (%p227) target = $region20
      $region19: #{uhg_graphsage_forward.3} parent=11 // pred_region
        %p230 = scmp.lt.s32.totalorder %s22, 0
        %s231 = scalar_select %p230, %s22, 0
        %s232 = scalar_lea.vmem %s3, %s231
      $region20: #{uhg_graphsage_forward.3} parent=11 // pred_fallthru
        _
      // Predicated region
      $region21: #{uhg_graphsage_forward.3} parent=11 // pred_check
        %p233 = pneg %p177
      $region22: #{uhg_graphsage_forward.3} parent=11 // pred_check_branch
        %235 = sbr.rel (%p233) target = $region24
      $region23: #{uhg_graphsage_forward.3} parent=11 // pred_region
        _
      $region24: #{uhg_graphsage_forward.3} parent=11 // pred_fallthru
        _
    $region12: #{uhg_graphsage_forward.3} parent=5 // pred_fallthru
      _
    %p236 = scmp.lt.s32.totalorder %s12, 2
    // Predicated region
    $region25: #{uhg_graphsage_forward.3} parent=5 // pred_check
      %p237 = pneg %p236
    $region26: #{uhg_graphsage_forward.3} parent=5 // pred_check_branch
      %239 = sbr.rel (%p237) target = $region28
    $region27: #{uhg_graphsage_forward.3} parent=5 // pred_region
      // Predicated region
      $region29: #{uhg_graphsage_forward.3} parent=27 // pred_check
        %p240 = pneg %p44
      $region30: #{uhg_graphsage_forward.3} parent=27 // pred_check_branch
        %242 = sbr.rel (%p240) target = $region32
      $region31: #{uhg_graphsage_forward.3} parent=27 // pred_region
        %p243 = scmp.lt.s32.totalorder %s19, 1
        %s244 = scalar_select %p243, %s19, 1
        %s245 = smul.addr %s244, 8
        %s246 = scalar_lea.vmem %s0, %s245
      $region32: #{uhg_graphsage_forward.3} parent=27 // pred_fallthru
        _
      // Predicated region
      $region33: #{uhg_graphsage_forward.3} parent=27 // pred_check
        %p247 = pneg %p96
      $region34: #{uhg_graphsage_forward.3} parent=27 // pred_check_branch
        %249 = sbr.rel (%p247) target = $region36
      $region35: #{uhg_graphsage_forward.3} parent=27 // pred_region
        %p250 = scmp.lt.s32.totalorder %s19, 1
        %s251 = scalar_select %p250, %s19, 1
        %s252 = smul.addr %s251, 8
        %s253 = scalar_lea.vmem %s2, %s252
      $region36: #{uhg_graphsage_forward.3} parent=27 // pred_fallthru
        _
      // Predicated region
      $region37: #{uhg_graphsage_forward.3} parent=27 // pred_check
        %p254 = pneg %p150
      $region38: #{uhg_graphsage_forward.3} parent=27 // pred_check_branch
        %256 = sbr.rel (%p254) target = $region40
      $region39: #{uhg_graphsage_forward.3} parent=27 // pred_region
        %p257 = scmp.lt.s32.totalorder %s19, 1
        %s258 = scalar_select %p257, %s19, 1
        %p259 = scmp.lt.s32.totalorder %s20, 0
        %s260 = scalar_select %p259, %s20, 0
        %s261 = sadd.s32 %s260, %s258
        %s262 = smul.addr %s261, 4
        %s263 = scalar_lea.vmem %s4, %s262
      $region40: #{uhg_graphsage_forward.3} parent=27 // pred_fallthru
        _
    $region28: #{uhg_graphsage_forward.3} parent=5 // pred_fallthru
      _
    %p264 = scmp.le.s32.totalorder 1, %s12
    %p265 = scmp.lt.s32.totalorder %s12, 3
    %p266 = pnand %p264, %p265
    %p267 = pneg %p266
    // Predicated region
    $region41: #{uhg_graphsage_forward.3} parent=5 // pred_check
      _
    $region42: #{uhg_graphsage_forward.3} parent=5 // pred_check_branch
      %269 = sbr.rel (%p266) target = $region44
    $region43: #{uhg_graphsage_forward.3} parent=5 // pred_region
      %s270 = ssub.s32 %s12, 1
      %p271 = scmp.lt.s32.totalorder %s21, 1
      %s272 = scalar_select %p271, %s21, 1
      %s273 = smul.addr %s272, 8
      %s274 = scalar_lea.vmem %s0, %s273
      %p275 = pneg %p50
      %p276 = pneg %p47
      %s277 = smul.u32 2, %s22
      %p278 = scmp.lt.s32.totalorder %s277, 1
      %s279 = scalar_select %p278, %s277, 1
      %s280 = smul.addr %s279, 8
      %s281 = scalar_lea.vmem %s1, %s280
      %p282 = pneg %p76
      %p283 = pneg %p73
      %p284 = scmp.lt.s32.totalorder %s21, 1
      %s285 = scalar_select %p284, %s21, 1
      %s286 = smul.addr %s285, 8
      %s287 = scalar_lea.vmem %s2, %s286
      %p288 = pneg %p102
      %p289 = pneg %p99
      %p290 = scmp.lt.s32.totalorder %s22, 0
      %s291 = scalar_select %p290, %s22, 0
      %s292 = scalar_lea.vmem %s3, %s291
      %p293 = pneg %p128
      %p294 = pneg %p125
      %p295 = scmp.lt.s32.totalorder %s21, 1
      %s296 = scalar_select %p295, %s21, 1
      %p297 = scmp.lt.s32.totalorder %s22, 0
      %s298 = scalar_select %p297, %s22, 0
      %s299 = sadd.s32 %s298, %s296
      %s300 = smul.addr %s299, 4
      %s301 = scalar_lea.vmem %s4, %s300
      %p302 = pneg %p156
      %p303 = pneg %p153
      %p304 = pneg %p177
      %p305 = pneg %p174
      %p306 = pneg %p203
      %p307 = pneg %p200
      %p308 = scmp.lt.s32.totalorder %s21, 1
      %s309 = scalar_select %p308, %s21, 1
      %s310 = smul.addr %s309, 8
      %s311 = scalar_lea.vmem %s6, %s310
      %p312 = scmp.lt.s32.totalorder %s21, 1
      %s313 = scalar_select %p312, %s21, 1
      %s314 = smul.addr %s313, 8
      %s315 = scalar_lea.vmem %s0, %s314
      %s316 = smul.u32 2, %s22
      %p317 = scmp.lt.s32.totalorder %s316, 1
      %s318 = scalar_select %p317, %s316, 1
      %s319 = smul.addr %s318, 8
      %s320 = scalar_lea.vmem %s1, %s319
      %s321 = smul.u32 2, %s22
      %p322 = scmp.lt.s32.totalorder %s21, 1
      %s323 = scalar_select %p322, %s21, 1
      %s324 = smul.addr %s323, 8
      %s325 = scalar_lea.vmem %s2, %s324
      %p326 = scmp.lt.s32.totalorder %s22, 0
      %s327 = scalar_select %p326, %s22, 0
      %s328 = scalar_lea.vmem %s3, %s327
      %p329 = scmp.lt.s32.totalorder %s21, 1
      %s330 = scalar_select %p329, %s21, 1
      %p331 = scmp.lt.s32.totalorder %s22, 0
      %s332 = scalar_select %p331, %s22, 0
      %s333 = sadd.s32 %s332, %s330
      %s334 = smul.addr %s333, 4
      %s335 = scalar_lea.vmem %s4, %s334
      %p336 = scmp.lt.s32.totalorder %s21, 1
      %s337 = scalar_select %p336, %s21, 1
      %s338 = smul.addr %s337, 8
      %s339 = scalar_lea.vmem %s6, %s338
      %p341 = scmp.eq.s32.totalorder %s22, 0
      // Predicated region
      $region45: #{uhg_graphsage_forward.3} parent=43 // pred_check
        %p342 = pneg %p341
      $region46: #{uhg_graphsage_forward.3} parent=43 // pred_check_branch
        %344 = sbr.rel (%p342) target = $region48
      $region47: #{uhg_graphsage_forward.3} parent=43 // pred_region
        %vm345 = vcmask 72704
        %346 = vst.msk [vmem:[#allocation2] sm:$0xff] %vm345, 0.0
      $region48: #{uhg_graphsage_forward.3} parent=43 // pred_fallthru
        _
      %v347 = vld [vmem:[%s315] sm:$0xff]
      %v348 = vld [vmem:[%s320] sm:$0xff]
      %v349 = vld [vmem:[%s320 + $0x8] sm:$0xff]
      %v350 = vpack.c.bf16 %v347, %v347
      %v351 = vpack.c.bf16 %v349, %v348
      %vm352 = vcmask 72704
      %v354 = vsel %vm352, %v350, 0
      %v357 = vsel %vm352, %v351, 0
      %359 = vmatprep.subr.bf16.mxu0 0
      %360 = vmatpush1.bf16.xpose.msra.mxu0 %v357
      %361 = vmatprep.subr.bf16.mxu0 0
      %362 = vmatpush1.bf16.xpose.msra.mxu0 0
      %363 = vmatprep.subr.bf16.mxu0 0
      %364 = vmatpush1.bf16.xpose.msra.mxu0 0
      %365 = vmatprep.subr.bf16.mxu0 0
      %366 = vmatpush1.bf16.xpose.msra.mxu0 0
      %367 = vmatprep.subr.bf16.mxu0 0
      %368 = vmatpush1.bf16.xpose.msra.mxu0 0
      %369 = vmatprep.subr.bf16.mxu0 0
      %370 = vmatpush1.bf16.xpose.msra.mxu0 0
      %371 = vmatprep.subr.bf16.mxu0 0
      %372 = vmatpush1.bf16.xpose.msra.mxu0 0
      %373 = vmatprep.subr.bf16.mxu0 0
      %374 = vmatpush1.bf16.xpose.msra.mxu0 0
      %375 = vmatprep.subr.bf16.mxu0 0
      %376 = vmatpush1.bf16.xpose.msra.mxu0 0
      %377 = vmatprep.subr.bf16.mxu0 0
      %378 = vmatpush1.bf16.xpose.msra.mxu0 0
      %379 = vmatprep.subr.bf16.mxu0 0
      %380 = vmatpush1.bf16.xpose.msra.mxu0 0
      %381 = vmatprep.subr.bf16.mxu0 0
      %382 = vmatpush1.bf16.xpose.msra.mxu0 0
      %383 = vmatprep.subr.bf16.mxu0 0
      %384 = vmatpush1.bf16.xpose.msra.mxu0 0
      %385 = vmatprep.subr.bf16.mxu0 0
      %386 = vmatpush1.bf16.xpose.msra.mxu0 0
      %387 = vmatprep.subr.bf16.mxu0 0
      %388 = vmatpush1.bf16.xpose.msra.mxu0 0
      %389 = vmatprep.subr.bf16.mxu0 0
      %390 = vmatpush1.bf16.xpose.msra.mxu0 0
      %391 = vmatprep.mubr.bf16.mxu0 0
      %392 = vmatmul.mubr.bf16.gmra.mrb[0].mxu0 %v354
      %v393 = vpop.f32.mrb[0].mxu0
      %v394 = vadd.f32 0.0, %v393
      %v395 = vpop.f32.mrb[0].mxu0
      %v396 = vpop.f32.mrb[0].mxu0
      %v397 = vpop.f32.mrb[0].mxu0
      %398 = vdwg.mxu0
      %v399 = vmul.f32 %v394, %v394
      %v400 = vld [vmem:[%s325] sm:$0xff]
      %402 = vset.pattern.permute.xlu0 0
      %403 = vperm.xlu0 %402, %v400
      %v404 = vpop.permute.xlu0 %403
      %v406 = vmul.f32 %v399, %v404
      %v407 = vld [vmem:[%s328] sm:$0x1]
      %v409 = vlaneseq
      %v410 = vshrl.u32 %v409, 7
      %v411 = vsub.s32 0, %v410
      %v412 = vrot.slane %v407, %v411
      %v414 = vmul.f32 %v406, %v412
      %v415 = vsub.f32 1.0, %v414
      %v416 = vmin.f32 %v415, 80.0
      %v417 = vmul.f32 %v416, 1.442695
      %v418 = vpow.pop %v417
      %v419 = vld [vmem:[%s335] sm:$0xf]
      %v420 = vpack.c.bf16 %v418, %v418
      %v421 = vmul.bf16 %v419, %v420
      %v422 = vlaneseq
      %v423 = vand.u32 %v422, 127
      %vm424 = vcmp.eq.s32.totalorder %v423, 8
      %v425 = vsel %vm424, 1, 0
      %vm426 = vcmp.eq.s32.totalorder %v425, 1
      %v427 = vsel %vm426, 1.0, %v348
      %v428 = vsel %vm426, 1.0, %v349
      %v429 = vpack.c.bf16 %v428, %v427
      %v430 = vld [vmem:[#allocation2] sm:$0xff]
      %vm431 = vcmask 130048
      %v433 = vsel %vm431, %v421, 0
      %435 = vmatprep.subr.bf16.mxu0 0
      %436 = vmatpush1.bf16.msra.mxu0 %v429
      %437 = vmatprep.subr.bf16.mxu0 0
      %438 = vmatpush1.bf16.msra.mxu0 0
      %439 = vmatprep.subr.bf16.mxu0 0
      %440 = vmatpush1.bf16.msra.mxu0 0
      %441 = vmatprep.subr.bf16.mxu0 0
      %442 = vmatpush1.bf16.msra.mxu0 0
      %443 = vmatprep.subr.bf16.mxu0 0
      %444 = vmatpush1.bf16.msra.mxu0 0
      %445 = vmatprep.subr.bf16.mxu0 0
      %446 = vmatpush1.bf16.msra.mxu0 0
      %447 = vmatprep.subr.bf16.mxu0 0
      %448 = vmatpush1.bf16.msra.mxu0 0
      %449 = vmatprep.subr.bf16.mxu0 0
      %450 = vmatpush1.bf16.msra.mxu0 0
      %451 = vmatprep.subr.bf16.mxu0 0
      %452 = vmatpush1.bf16.msra.mxu0 0
      %453 = vmatprep.subr.bf16.mxu0 0
      %454 = vmatpush1.bf16.msra.mxu0 0
      %455 = vmatprep.subr.bf16.mxu0 0
      %456 = vmatpush1.bf16.msra.mxu0 0
      %457 = vmatprep.subr.bf16.mxu0 0
      %458 = vmatpush1.bf16.msra.mxu0 0
      %459 = vmatprep.subr.bf16.mxu0 0
      %460 = vmatpush1.bf16.msra.mxu0 0
      %461 = vmatprep.subr.bf16.mxu0 0
      %462 = vmatpush1.bf16.msra.mxu0 0
      %463 = vmatprep.subr.bf16.mxu0 0
      %464 = vmatpush1.bf16.msra.mxu0 0
      %465 = vmatprep.subr.bf16.mxu0 0
      %466 = vmatpush1.bf16.msra.mxu0 0
      %467 = vmatprep.mubr.bf16.mxu0 0
      %468 = vmatmul.mubr.bf16.gmra.mrb[0].mxu0 %v433
      %v469 = vpop.f32.mrb[0].mxu0
      %v470 = vadd.f32 0.0, %v469
      %v471 = vpop.f32.mrb[0].mxu0
      %v472 = vpop.f32.mrb[0].mxu0
      %v473 = vpop.f32.mrb[0].mxu0
      %474 = vdwg.mxu0
      %v475 = vadd.f32 %v430, %v470
      %476 = vst.msk [vmem:[#allocation2] sm:$0xff] %vm352, %v475
      // Predicated region
      $region49: #{uhg_graphsage_forward.3} parent=43 // pred_check
        %p477 = pneg %p341
      $region50: #{uhg_graphsage_forward.3} parent=43 // pred_check_branch
        %479 = sbr.rel (%p477) target = $region52
      $region51: #{uhg_graphsage_forward.3} parent=43 // pred_region
        %v480 = vld [vmem:[#allocation2] sm:$0xff]
        %v481 = vmax.f32 %v480, 1e-06
        %483 = vset.pattern.permute.xlu0 8
        %484 = vperm.xlu0 %483, %v481
        %v485 = vpop.permute.xlu0 %484
        %v487 = vrcp.pop %v485
        %v488 = vmul.f32 %v480, %v487
        %490 = vrot.lane.b32.xlu0 %v347, 8
        %v491 = vpop.permute.xlu0 %490
        %vm493 = vcmask 64512
        %v494 = vsel %vm493, %v488, %v491
        %v495 = vld [vmem:[%s5] sm:$0xff]
        %v496 = vld [vmem:[%s5 + $0x8] sm:$0xff]
        %v498 = vsel %vm431, %v494, 0
        %500 = vmatprep.subr.mxu0 0.0
        %501 = vmatpush1.msra.mxu0 %v495
        %502 = vmatprep.subr.mxu0 0.0
        %503 = vmatpush1.msra.mxu0 %v496
        %504 = vmatprep.subr.mxu0 0.0
        %505 = vmatpush1.msra.mxu0 0.0
        %506 = vmatprep.subr.mxu0 0.0
        %507 = vmatpush1.msra.mxu0 0.0
        %508 = vmatprep.subr.mxu0 0.0
        %509 = vmatpush1.msra.mxu0 0.0
        %510 = vmatprep.subr.mxu0 0.0
        %511 = vmatpush1.msra.mxu0 0.0
        %512 = vmatprep.subr.mxu0 0.0
        %513 = vmatpush1.msra.mxu0 0.0
        %514 = vmatprep.subr.mxu0 0.0
        %515 = vmatpush1.msra.mxu0 0.0
        %516 = vmatprep.subr.mxu0 0.0
        %517 = vmatpush1.msra.mxu0 0.0
        %518 = vmatprep.subr.mxu0 0.0
        %519 = vmatpush1.msra.mxu0 0.0
        %520 = vmatprep.subr.mxu0 0.0
        %521 = vmatpush1.msra.mxu0 0.0
        %522 = vmatprep.subr.mxu0 0.0
        %523 = vmatpush1.msra.mxu0 0.0
        %524 = vmatprep.subr.mxu0 0.0
        %525 = vmatpush1.msra.mxu0 0.0
        %526 = vmatprep.subr.mxu0 0.0
        %527 = vmatpush1.msra.mxu0 0.0
        %528 = vmatprep.subr.mxu0 0.0
        %529 = vmatpush1.msra.mxu0 0.0
        %530 = vmatprep.subr.mxu0 0.0
        %531 = vmatpush1.msra.mxu0 0.0
        %532 = vmatprep.subr.mxu0 0.0
        %533 = vmatpush1.msra.mxu0 0.0
        %534 = vmatprep.subr.mxu0 0.0
        %535 = vmatpush1.msra.mxu0 0.0
        %536 = vmatprep.subr.mxu0 0.0
        %537 = vmatpush1.msra.mxu0 0.0
        %538 = vmatprep.subr.mxu0 0.0
        %539 = vmatpush1.msra.mxu0 0.0
        %540 = vmatprep.subr.mxu0 0.0
        %541 = vmatpush1.msra.mxu0 0.0
        %542 = vmatprep.subr.mxu0 0.0
        %543 = vmatpush1.msra.mxu0 0.0
        %544 = vmatprep.subr.mxu0 0.0
        %545 = vmatpush1.msra.mxu0 0.0
        %546 = vmatprep.subr.mxu0 0.0
        %547 = vmatpush1.msra.mxu0 0.0
        %548 = vmatprep.subr.mxu0 0.0
        %549 = vmatpush1.msra.mxu0 0.0
        %550 = vmatprep.subr.mxu0 0.0
        %551 = vmatpush1.msra.mxu0 0.0
        %552 = vmatprep.subr.mxu0 0.0
        %553 = vmatpush1.msra.mxu0 0.0
        %554 = vmatprep.subr.mxu0 0.0
        %555 = vmatpush1.msra.mxu0 0.0
        %556 = vmatprep.subr.mxu0 0.0
        %557 = vmatpush1.msra.mxu0 0.0
        %558 = vmatprep.subr.mxu0 0.0
        %559 = vmatpush1.msra.mxu0 0.0
        %560 = vmatprep.subr.mxu0 0.0
        %561 = vmatpush1.msra.mxu0 0.0
        %562 = vmatprep.subr.mxu0 0.0
        %563 = vmatpush1.msra.mxu0 0.0
        %564 = vmatprep.mubr.f32.mxu0 0.0
        %565 = vmatmul.mubr.f32.gmra.mrb[0].mxu0 %v498
        %v566 = vpop.f32.mrb[0].mxu0
        %v567 = vadd.f32 0.0, %v566
        %v568 = vpop.f32.mrb[0].mxu0
        %569 = vdwg.mxu0
        %v570 = vmax.f32 %v567, 0.0
        %vm571 = vcmask 261120
        %572 = vst.msk [vmem:[%s339] sm:$0xff] %vm571, %v570
      $region52: #{uhg_graphsage_forward.3} parent=43 // pred_fallthru
        _
      %p573 = scmp.lt.s32.totalorder %s21, 1
      %s574 = scalar_select %p573, %s21, 1
      %s575 = smul.addr %s574, 8
      %s576 = scalar_lea.vmem %s6, %s575
      // Predicated region
      $region53: #{uhg_graphsage_forward.3} parent=43 // pred_check
        %p577 = pneg %p200
      $region54: #{uhg_graphsage_forward.3} parent=43 // pred_check_branch
        %579 = sbr.rel (%p577) target = $region56
      $region55: #{uhg_graphsage_forward.3} parent=43 // pred_region
        _
      $region56: #{uhg_graphsage_forward.3} parent=43 // pred_fallthru
        _
    $region44: #{uhg_graphsage_forward.3} parent=5 // pred_fallthru
      _
    %p580 = scmp.le.s32.totalorder 2, %s12
    // Predicated region
    $region57: #{uhg_graphsage_forward.3} parent=5 // pred_check
      %p581 = pneg %p580
    $region58: #{uhg_graphsage_forward.3} parent=5 // pred_check_branch
      %583 = sbr.rel (%p581) target = $region60
    $region59: #{uhg_graphsage_forward.3} parent=5 // pred_region
      %s584 = ssub.s32 %s12, 2
      // Predicated region
      $region61: #{uhg_graphsage_forward.3} parent=59 // pred_check
        %p585 = pneg %p206
      $region62: #{uhg_graphsage_forward.3} parent=59 // pred_check_branch
        %587 = sbr.rel (%p585) target = $region64
      $region63: #{uhg_graphsage_forward.3} parent=59 // pred_region
        %p588 = scmp.lt.s32.totalorder %s23, 1
        %s589 = scalar_select %p588, %s23, 1
        %s590 = smul.addr %s589, 8
        %s591 = scalar_lea.vmem %s6, %s590
      $region64: #{uhg_graphsage_forward.3} parent=59 // pred_fallthru
        _
    $region60: #{uhg_graphsage_forward.3} parent=5 // pred_fallthru
      _
  $region6: #{uhg_graphsage_forward.3} parent=0 // loop_footer
    %s16 = sadd.s32 1, %s12
  $region7: #{uhg_graphsage_forward.3} parent=0 // loop_footer_branch
    %11 = sbr.rel target = $region3
  $region8: #{uhg_graphsage_forward.3} parent=0 // loop_exit
    _

</llo_original>
